<compile_context>
chip_gen: v7x
topology: tpu7x:2x2x1
jax: 0.10.0
libtpu: 0.0.40
codegen_flags: <defaults>
</compile_context>

<pallas_src>
import functools
import math

import jax
import jax.numpy as jnp
from jax import lax
from jax.experimental import pallas as pl
from jax.experimental.pallas import tpu as pltpu


def _supcon_kernel(lab_r_ref, lab_c_ref, cnt_ref, a_ref, c_ref, loss_ref,
                   m_sc, l_sc, plog_sc, *, n_real, n_padded, loss_scale):
    """One (row_tile x col_tile) block of the SupCon loss.

    lab_r_ref : [TR, 1]  int32   labels of the anchor rows of this tile
    lab_c_ref : [1, TC]  int32   labels of the contrast columns of this tile
    cnt_ref   : [TR, 1]  f32     per-anchor positive count (precomputed)
    a_ref     : [TR, Dp] f32/bf16 anchor features, pre-scaled by 1/T
    c_ref     : [TC, Dp] f32/bf16 contrast features (raw)
    loss_ref  : [TR, 1]  f32     per-anchor loss (written on last column step)
    scratch   : 3 x [TR, 1] f32  running max / running sum / sum(pos*logit)
    """
    ri = pl.program_id(0)
    ci = pl.program_id(1)
    tr = a_ref.shape[0]
    tc = c_ref.shape[0]
    has_col_pad = n_padded > n_real          # trace-time constant

    @pl.when(ci == 0)
    def _init():
        m_sc[...] = jnp.full_like(m_sc, -jnp.inf)
        l_sc[...] = jnp.zeros_like(l_sc)
        plog_sc[...] = jnp.zeros_like(plog_sc)

    # Raw logits: anchor rows are already scaled by 1/T in HBM; contract on D
    # (no transpose of the contrast operand).  f32 accumulation on the MXU.
    s = lax.dot_general(a_ref[...], c_ref[...],
                        dimension_numbers=(((1,), (1,)), ((), ())),
                        preferred_element_type=jnp.float32)

    pos_lab = lab_r_ref[...] == lab_c_ref[...]       # (tr,1)==(1,tc) -> (tr,tc)

    # Online LSE state update.  The running max may safely include the
    # self/padded columns: the reference also maxes over the full row, and
    # lse = m + log(l) is invariant to a larger m (only l's terms matter).
    m_prev = m_sc[...]
    m_new = jnp.maximum(m_prev, jnp.max(s, axis=1, keepdims=True))
    alpha = jnp.exp(m_prev - m_new)
    p = jnp.exp(s - m_new)

    row_lo = ri * tr
    col_lo = ci * tc
    has_diag = jnp.logical_and(row_lo < col_lo + tc, col_lo < row_lo + tr)
    if has_col_pad:
        needs_mask = jnp.logical_or(has_diag, col_lo + tc > n_real)
    else:
        needs_mask = has_diag

    @pl.when(needs_mask)
    def _masked_block():
        # Only blocks touching the diagonal (or the padded tail) pay for the
        # iota/compare/select passes.
        row_g = row_lo + lax.broadcasted_iota(jnp.int32, (tr, 1), 0)
        col_g = col_lo + lax.broadcasted_iota(jnp.int32, (1, tc), 1)
        keep = row_g != col_g                         # broadcast -> (tr, tc)
        if has_col_pad:
            keep = jnp.logical_and(keep, col_g < n_real)
        pos = jnp.logical_and(pos_lab, keep)
        plog_sc[...] += jnp.sum(jnp.where(pos, s, 0.0), axis=1, keepdims=True)
        l_sc[...] = alpha * l_sc[...] + jnp.sum(jnp.where(keep, p, 0.0),
                                                axis=1, keepdims=True)

    @pl.when(jnp.logical_not(needs_mask))
    def _plain_block():
        plog_sc[...] += jnp.sum(jnp.where(pos_lab, s, 0.0), axis=1, keepdims=True)
        l_sc[...] = alpha * l_sc[...] + jnp.sum(p, axis=1, keepdims=True)

    m_sc[...] = m_new

    @pl.when(ci == pl.num_programs(1) - 1)
    def _epilogue():
        lse = m_sc[...] + jnp.log(l_sc[...])          # log sum_{j!=i, valid} exp(s_ij)
        cnt = cnt_ref[...]
        safe_cnt = jnp.maximum(cnt, 1.0)
        mean_log_prob_pos = (plog_sc[...] - cnt * lse) / safe_cnt
        # Anchors with zero positives: reference yields NaN; we emit 0 (documented
        # deviation; only possible when n_views == 1 with a unique label).
        loss_ref[...] = jnp.where(cnt > 0.0, loss_scale * mean_log_prob_pos, 0.0)


def _round_up(x, m):
    return ((x + m - 1) // m) * m


def _pick_tile(n, candidates=(512, 256, 128)):
    for t in candidates:
        if t <= n and n % t == 0:
            return t
    return n


def supcon_loss_pallas(features, labels=None, *, temperature=0.07,
                       base_temperature=0.07, row_tile=None, col_tile=None,
                       use_bf16_matmul=True):
    """features: [bsz, n_views, feature_dim]; labels: [bsz] int or None."""
    features = jnp.asarray(features)
    if features.ndim > 3:
        features = features.reshape(features.shape[0], features.shape[1], -1)
    if features.ndim < 3:
        raise ValueError('`features` needs to be [bsz, n_views, ...]')
    bsz, n_views, dim = features.shape
    n = n_views * bsz

    # contrast_feature = cat(unbind(features, dim=1), dim=0)  (view-major order)
    contrast = jnp.reshape(jnp.transpose(features, (1, 0, 2)),
                           (n, dim)).astype(jnp.float32)

    # labels=None in the reference means mask=eye(bsz): each sample is its own class.
    # TODO(synk): an explicit user-provided dense `mask` argument is not wired
    #             through this kernel (labels / eye path only).
    if labels is None:
        base_labels = jnp.arange(bsz, dtype=jnp.int32)
    else:
        base_labels = jnp.reshape(jnp.asarray(labels), (bsz,)).astype(jnp.int32)
    lab = jnp.tile(base_labels, (n_views,))          # [n], matches view-major features

    # Per-anchor positive count (== reference mask.sum(1)):
    #   n_views * (# batch samples sharing the label) - 1.   O(bsz log bsz).
    sorted_lab = jnp.sort(base_labels)
    per_sample = (jnp.searchsorted(sorted_lab, base_labels, side='right')
                  - jnp.searchsorted(sorted_lab, base_labels, side='left'))
    cnt = (n_views * jnp.tile(per_sample, (n_views,)) - 1).astype(jnp.float32)

    # ---- tiling & padding (keep the tiled pipeline for any N) ----
    dp = _round_up(dim, 128)                 # zero-pad D: zeros don't change F·Fᵀ
    n_pad = _round_up(n, 128)
    tr = int(row_tile) if row_tile is not None else _pick_tile(n_pad)
    tc = int(col_tile) if col_tile is not None else _pick_tile(n_pad)
    n_pad = _round_up(n_pad, math.lcm(tr, tc))
    pad_rows = n_pad - n

    if pad_rows or dp != dim:
        contrast = jnp.pad(contrast, ((0, pad_rows), (0, dp - dim)))
    if pad_rows:
        # Sentinel label never equals a real label -> padded columns are never
        # positives; their LSE contribution is masked in-kernel (col >= n).
        sentinel = jnp.min(lab) - 1
        lab = jnp.concatenate([lab, jnp.zeros((pad_rows,), jnp.int32) + sentinel])
        cnt = jnp.concatenate([cnt, jnp.zeros((pad_rows,), jnp.float32)])

    # Pre-scale the anchor copy by 1/T (kernel never scales a [tr,tc] tile) and
    # stream both operands in bf16 (halves HBM traffic, no in-kernel casts);
    # MXU accumulation stays f32 via preferred_element_type.
    mm_dtype = jnp.bfloat16 if use_bf16_matmul else jnp.float32
    anchor = (contrast * (1.0 / float(temperature))).astype(mm_dtype)
    contrast_mm = contrast.astype(mm_dtype)

    lab_r = lab.reshape(n_pad, 1)
    lab_c = lab.reshape(1, n_pad)
    cnt_col = cnt.reshape(n_pad, 1)

    grid = (n_pad // tr, n_pad // tc)
    kernel = functools.partial(
        _supcon_kernel, n_real=n, n_padded=n_pad,
        loss_scale=-(float(temperature) / float(base_temperature)))

    per_anchor = pl.pallas_call(
        kernel,
        out_shape=jax.ShapeDtypeStruct((n_pad, 1), jnp.float32),
        grid_spec=pltpu.PrefetchScalarGridSpec(
            num_scalar_prefetch=0,
            grid=grid,
            in_specs=[
                pl.BlockSpec((tr, 1), lambda ri, ci: (ri, 0)),    # row labels
                pl.BlockSpec((1, tc), lambda ri, ci: (0, ci)),    # col labels
                pl.BlockSpec((tr, 1), lambda ri, ci: (ri, 0)),    # positive counts
                pl.BlockSpec((tr, dp), lambda ri, ci: (ri, 0)),   # anchors (pre-scaled)
                pl.BlockSpec((tc, dp), lambda ri, ci: (ci, 0)),   # contrast
            ],
            out_specs=pl.BlockSpec((tr, 1), lambda ri, ci: (ri, 0)),
            scratch_shapes=[pltpu.VMEM((tr, 1), jnp.float32)] * 3),
        compiler_params=pltpu.CompilerParams(
            dimension_semantics=("parallel", "arbitrary"),
            vmem_limit_bytes=48 * 1024 * 1024),
    )(lab_r, lab_c, cnt_col, anchor, contrast_mm)

    # loss.view(anchor_count, batch_size).mean() == mean over all N real anchors.
    return jnp.mean(per_anchor[:n, 0])


def supcon_loss_ref(features, labels=None, *, temperature=0.07,
                    base_temperature=0.07):
    """Pure-JAX reference mirroring the PyTorch SupConLoss forward."""
    bsz, n_views, dim = features.shape
    contrast = jnp.reshape(jnp.transpose(features, (1, 0, 2)),
                           (n_views * bsz, dim)).astype(jnp.float32)
    if labels is None:
        small_mask = jnp.eye(bsz, dtype=jnp.float32)
    else:
        labels = jnp.reshape(labels, (bsz, 1))
        small_mask = (labels == labels.T).astype(jnp.float32)
    mask = jnp.tile(small_mask, (n_views, n_views))
    n = n_views * bsz
    logits = contrast @ contrast.T / temperature
    logits = logits - jnp.max(logits, axis=1, keepdims=True)
    logits_mask = 1.0 - jnp.eye(n, dtype=jnp.float32)
    mask = mask * logits_mask
    exp_logits = jnp.exp(logits) * logits_mask
    log_prob = logits - jnp.log(jnp.sum(exp_logits, axis=1, keepdims=True))
    mean_log_prob_pos = jnp.sum(mask * log_prob, axis=1) / jnp.sum(mask, axis=1)
    loss = -(temperature / base_temperature) * mean_log_prob_pos
    return jnp.mean(loss)


if __name__ == "__main__":
    # DifficultyWeightedSupConLoss(temperature=0.07) -> SupConLoss(temperature=0.07,
    # contrast_mode='all', base_temperature=0.07); legacy forward == standard SupCon.
    key = jax.random.PRNGKey(0)
    k1, k2, k3, k4 = jax.random.split(key, 4)

    # --- small test: N=16 padded to 128 (exercises padding + masked branch), f32 path ---
    bsz, n_views, feat_dim = 8, 2, 32
    features = jax.random.normal(k1, (bsz, n_views, feat_dim), dtype=jnp.float32)
    features = features / jnp.linalg.norm(features, axis=-1, keepdims=True)
    labels = jax.random.randint(k2, (bsz,), 0, 3, dtype=jnp.int32)

    out1 = jax.block_until_ready(
        supcon_loss_pallas(features, labels, use_bf16_matmul=False))
    ref1 = supcon_loss_ref(features, labels)
    assert jnp.abs(out1 - ref1) < 5e-4, (out1, ref1)

    # labels=None path (mask = eye(bsz))
    out1b = jax.block_until_ready(
        supcon_loss_pallas(features, None, use_bf16_matmul=False))
    ref1b = supcon_loss_ref(features, None)
    assert jnp.abs(out1b - ref1b) < 5e-4, (out1b, ref1b)

    # --- tiled test (2x2 grid: online-LSE reduction + off-diagonal fast path), f32 ---
    bsz2, n_views2, feat_dim2 = 128, 2, 32
    features2 = jax.random.normal(k3, (bsz2, n_views2, feat_dim2), dtype=jnp.float32)
    features2 = features2 / jnp.linalg.norm(features2, axis=-1, keepdims=True)
    labels2 = jax.random.randint(k4, (bsz2,), 0, 10, dtype=jnp.int32)

    out2 = jax.block_until_ready(
        supcon_loss_pallas(features2, labels2, row_tile=128, col_tile=128,
                           use_bf16_matmul=False))
    ref2 = supcon_loss_ref(features2, labels2)
    assert jnp.abs(out2 - ref2) < 5e-4, (out2, ref2)

    # --- bf16-in-HBM default path (perf mode): looser tolerance for bf16 inputs ---
    out3 = jax.block_until_ready(
        supcon_loss_pallas(features2, labels2, row_tile=128, col_tile=128))
    assert jnp.abs(out3 - ref2) < 2e-2 * jnp.abs(ref2) + 2e-2, (out3, ref2)

    print("KERNEL_OK")
</pallas_src>

<mosaic_0001>
module attributes {stable_mosaic.version = 11 : i64} {
  func.func @_supcon_kernel(%arg0: i32, %arg1: i32, %arg2: memref<128x1xi32, #tpu.memory_space<vmem>>, %arg3: memref<1x128xi32, #tpu.memory_space<vmem>>, %arg4: memref<128x1xf32, #tpu.memory_space<vmem>>, %arg5: memref<128x128xf32, #tpu.memory_space<vmem>>, %arg6: memref<128x128xf32, #tpu.memory_space<vmem>>, %arg7: memref<128x1xf32, #tpu.memory_space<vmem>>, %arg8: memref<128x1xf32, #tpu.memory_space<vmem>>, %arg9: memref<128x1xf32, #tpu.memory_space<vmem>>, %arg10: memref<128x1xf32, #tpu.memory_space<vmem>>) attributes {dimension_semantics = [#tpu.dimension_semantics<parallel>, #tpu.dimension_semantics<arbitrary>], iteration_bounds = array<i64: 1, 1>, scalar_prefetch = 0 : i64, scratch_operands = 3 : i64, tpu.core_type = #tpu.core_type<tc>, window_params = [{transform_indices = @transform_0, window_bounds = array<i64: 128, 1>}, {transform_indices = @transform_1, window_bounds = array<i64: 1, 128>}, {transform_indices = @transform_2, window_bounds = array<i64: 128, 1>}, {transform_indices = @transform_3, window_bounds = array<i64: 128, 128>}, {transform_indices = @transform_4, window_bounds = array<i64: 128, 128>}, {transform_indices = @transform_5, window_bounds = array<i64: 128, 1>}]} {
    %c0_i32 = arith.constant 0 : i32
    %0 = arith.cmpi eq, %arg1, %c0_i32 : i32
    %1 = arith.extui %0 : i1 to i32
    %c0_i32_0 = arith.constant 0 : i32
    %2 = arith.cmpi ne, %1, %c0_i32_0 : i32
    scf.if %2 {
      %cst_21 = arith.constant 0xFF800000 : f32
      %39 = vector.broadcast %cst_21 : f32 to vector<128x1xf32>
      %c0_22 = arith.constant 0 : index
      %c0_23 = arith.constant 0 : index
      %40 = vector.load %arg8[%c0_22, %c0_23] : memref<128x1xf32, #tpu.memory_space<vmem>>, vector<128x1xf32>
      tpu.vector_store %arg8[%c0_22, %c0_23], %39 {strides = array<i32>} : memref<128x1xf32, #tpu.memory_space<vmem>>, vector<128x1xf32>,
      %cst_24 = arith.constant 0.000000e+00 : f32
      %41 = vector.broadcast %cst_24 : f32 to vector<128x1xf32>
      %c0_25 = arith.constant 0 : index
      %c0_26 = arith.constant 0 : index
      %42 = vector.load %arg9[%c0_25, %c0_26] : memref<128x1xf32, #tpu.memory_space<vmem>>, vector<128x1xf32>
      tpu.vector_store %arg9[%c0_25, %c0_26], %41 {strides = array<i32>} : memref<128x1xf32, #tpu.memory_space<vmem>>, vector<128x1xf32>,
      %cst_27 = arith.constant 0.000000e+00 : f32
      %43 = vector.broadcast %cst_27 : f32 to vector<128x1xf32>
      %c0_28 = arith.constant 0 : index
      %c0_29 = arith.constant 0 : index
      %44 = vector.load %arg10[%c0_28, %c0_29] : memref<128x1xf32, #tpu.memory_space<vmem>>, vector<128x1xf32>
      tpu.vector_store %arg10[%c0_28, %c0_29], %43 {strides = array<i32>} : memref<128x1xf32, #tpu.memory_space<vmem>>, vector<128x1xf32>,
    } else {
    }
    %c0 = arith.constant 0 : index
    %c0_1 = arith.constant 0 : index
    %3 = vector.load %arg5[%c0, %c0_1] : memref<128x128xf32, #tpu.memory_space<vmem>>, vector<128x128xf32>
    %c0_2 = arith.constant 0 : index
    %c0_3 = arith.constant 0 : index
    %4 = vector.load %arg6[%c0_2, %c0_3] : memref<128x128xf32, #tpu.memory_space<vmem>>, vector<128x128xf32>
    %cst = arith.constant dense<0.000000e+00> : vector<128x128xf32>
    %5 = tpu.matmul %3, %4, %cst {dimension_numbers = #tpu.dot_dimension_numbers<[1], [1], [0], [0], [0, 0, 1, 0], [], []>} : vector<128x128xf32>, vector<128x128xf32>, vector<128x128xf32> -> vector<128x128xf32>
    %c0_4 = arith.constant 0 : index
    %c0_5 = arith.constant 0 : index
    %6 = vector.load %arg2[%c0_4, %c0_5] : memref<128x1xi32, #tpu.memory_space<vmem>>, vector<128x1xi32>
    %c0_6 = arith.constant 0 : index
    %c0_7 = arith.constant 0 : index
    %7 = vector.load %arg3[%c0_6, %c0_7] : memref<1x128xi32, #tpu.memory_space<vmem>>, vector<1x128xi32>
    %8 = vector.broadcast %6 : vector<128x1xi32> to vector<128x128xi32>
    %9 = vector.broadcast %7 : vector<1x128xi32> to vector<128x128xi32>
    %10 = arith.cmpi eq, %8, %9 : vector<128x128xi32>
    %c0_8 = arith.constant 0 : index
    %c0_9 = arith.constant 0 : index
    %11 = vector.load %arg8[%c0_8, %c0_9] : memref<128x1xf32, #tpu.memory_space<vmem>>, vector<128x1xf32>
    %cst_10 = arith.constant dense<0xFF800000> : vector<128xf32>
    %12 = vector.multi_reduction <maximumf>, %5, %cst_10 [1] : vector<128x128xf32> to vector<128xf32>
    %13 = vector.shape_cast %12 : vector<128xf32> to vector<128x1xf32>
    %14 = arith.maximumf %11, %13 : vector<128x1xf32>
    %15 = arith.subf %11, %14 : vector<128x1xf32>
    %16 = math.exp %15 : vector<128x1xf32>
    %17 = vector.broadcast %14 : vector<128x1xf32> to vector<128x128xf32>
    %18 = arith.subf %5, %17 : vector<128x128xf32>
    %19 = math.exp %18 : vector<128x128xf32>
    %c128_i32 = arith.constant 128 : i32
    %20 = arith.muli %arg0, %c128_i32 : i32
    %c128_i32_11 = arith.constant 128 : i32
    %21 = arith.muli %arg1, %c128_i32_11 : i32
    %c128_i32_12 = arith.constant 128 : i32
    %22 = arith.addi %21, %c128_i32_12 : i32
    %23 = arith.cmpi slt, %20, %22 : i32
    %c128_i32_13 = arith.constant 128 : i32
    %24 = arith.addi %20, %c128_i32_13 : i32
    %25 = arith.cmpi slt, %21, %24 : i32
    %26 = arith.andi %23, %25 : i1
    %c128_i32_14 = arith.constant 128 : i32
    %27 = arith.addi %21, %c128_i32_14 : i32
    %c16_i32 = arith.constant 16 : i32
    %28 = arith.cmpi sgt, %27, %c16_i32 : i32
    %29 = arith.ori %26, %28 : i1
    %30 = arith.extui %29 : i1 to i32
    %c0_i32_15 = arith.constant 0 : i32
    %31 = arith.cmpi ne, %30, %c0_i32_15 : i32
    scf.if %31 {
      %39 = tpu.iota {dimensions = array<i32: 0>} : vector<128x1xi32>
      %40 = vector.broadcast %20 : i32 to vector<128x1xi32>
      %41 = arith.addi %40, %39 : vector<128x1xi32>
      %42 = tpu.iota {dimensions = array<i32: 1>} : vector<1x128xi32>
      %43 = vector.broadcast %21 : i32 to vector<1x128xi32>
      %44 = arith.addi %43, %42 : vector<1x128xi32>
      %45 = vector.broadcast %41 : vector<128x1xi32> to vector<128x128xi32>
      %46 = vector.broadcast %44 : vector<1x128xi32> to vector<128x128xi32>
      %47 = arith.cmpi ne, %45, %46 : vector<128x128xi32>
      %c16_i32_21 = arith.constant 16 : i32
      %48 = vector.broadcast %c16_i32_21 : i32 to vector<1x128xi32>
      %49 = arith.cmpi slt, %44, %48 : vector<1x128xi32>
      %50 = vector.broadcast %49 : vector<1x128xi1> to vector<128x128xi1>
      %51 = arith.andi %47, %50 : vector<128x128xi1>
      %52 = arith.andi %10, %51 : vector<128x128xi1>
      %c0_22 = arith.constant 0 : index
      %c0_23 = arith.constant 0 : index
      %53 = vector.load %arg10[%c0_22, %c0_23] : memref<128x1xf32, #tpu.memory_space<vmem>>, vector<128x1xf32>
      %cst_24 = arith.constant 0.000000e+00 : f32
      %54 = vector.broadcast %cst_24 : f32 to vector<128x128xf32>
      %55 = arith.select %52, %5, %54 : vector<128x128xi1>, vector<128x128xf32>
      %cst_25 = arith.constant dense<0.000000e+00> : vector<128xf32>
      %56 = vector.multi_reduction <add>, %55, %cst_25 [1] : vector<128x128xf32> to vector<128xf32>
      %57 = vector.shape_cast %56 : vector<128xf32> to vector<128x1xf32>
      %58 = arith.addf %53, %57 : vector<128x1xf32>
      %c0_26 = arith.constant 0 : index
      %c0_27 = arith.constant 0 : index
      %59 = vector.load %arg10[%c0_26, %c0_27] : memref<128x1xf32, #tpu.memory_space<vmem>>, vector<128x1xf32>
      tpu.vector_store %arg10[%c0_26, %c0_27], %58 {strides = array<i32>} : memref<128x1xf32, #tpu.memory_space<vmem>>, vector<128x1xf32>,
      %c0_28 = arith.constant 0 : index
      %c0_29 = arith.constant 0 : index
      %60 = vector.load %arg9[%c0_28, %c0_29] : memref<128x1xf32, #tpu.memory_space<vmem>>, vector<128x1xf32>
      %61 = arith.mulf %16, %60 : vector<128x1xf32>
      %cst_30 = arith.constant 0.000000e+00 : f32
      %62 = vector.broadcast %cst_30 : f32 to vector<128x128xf32>
      %63 = arith.select %51, %19, %62 : vector<128x128xi1>, vector<128x128xf32>
      %cst_31 = arith.constant dense<0.000000e+00> : vector<128xf32>
      %64 = vector.multi_reduction <add>, %63, %cst_31 [1] : vector<128x128xf32> to vector<128xf32>
      %65 = vector.shape_cast %64 : vector<128xf32> to vector<128x1xf32>
      %66 = arith.addf %61, %65 : vector<128x1xf32>
      %c0_32 = arith.constant 0 : index
      %c0_33 = arith.constant 0 : index
      %67 = vector.load %arg9[%c0_32, %c0_33] : memref<128x1xf32, #tpu.memory_space<vmem>>, vector<128x1xf32>
      tpu.vector_store %arg9[%c0_32, %c0_33], %66 {strides = array<i32>} : memref<128x1xf32, #tpu.memory_space<vmem>>, vector<128x1xf32>,
    } else {
    }
    %true = arith.constant true
    %32 = arith.xori %29, %true : i1
    %33 = arith.extui %32 : i1 to i32
    %c0_i32_16 = arith.constant 0 : i32
    %34 = arith.cmpi ne, %33, %c0_i32_16 : i32
    scf.if %34 {
      %c0_21 = arith.constant 0 : index
      %c0_22 = arith.constant 0 : index
      %39 = vector.load %arg10[%c0_21, %c0_22] : memref<128x1xf32, #tpu.memory_space<vmem>>, vector<128x1xf32>
      %cst_23 = arith.constant 0.000000e+00 : f32
      %40 = vector.broadcast %cst_23 : f32 to vector<128x128xf32>
      %41 = arith.select %10, %5, %40 : vector<128x128xi1>, vector<128x128xf32>
      %cst_24 = arith.constant dense<0.000000e+00> : vector<128xf32>
      %42 = vector.multi_reduction <add>, %41, %cst_24 [1] : vector<128x128xf32> to vector<128xf32>
      %43 = vector.shape_cast %42 : vector<128xf32> to vector<128x1xf32>
      %44 = arith.addf %39, %43 : vector<128x1xf32>
      %c0_25 = arith.constant 0 : index
      %c0_26 = arith.constant 0 : index
      %45 = vector.load %arg10[%c0_25, %c0_26] : memref<128x1xf32, #tpu.memory_space<vmem>>, vector<128x1xf32>
      tpu.vector_store %arg10[%c0_25, %c0_26], %44 {strides = array<i32>} : memref<128x1xf32, #tpu.memory_space<vmem>>, vector<128x1xf32>,
      %c0_27 = arith.constant 0 : index
      %c0_28 = arith.constant 0 : index
      %46 = vector.load %arg9[%c0_27, %c0_28] : memref<128x1xf32, #tpu.memory_space<vmem>>, vector<128x1xf32>
      %47 = arith.mulf %16, %46 : vector<128x1xf32>
      %cst_29 = arith.constant dense<0.000000e+00> : vector<128xf32>
      %48 = vector.multi_reduction <add>, %19, %cst_29 [1] : vector<128x128xf32> to vector<128xf32>
      %49 = vector.shape_cast %48 : vector<128xf32> to vector<128x1xf32>
      %50 = arith.addf %47, %49 : vector<128x1xf32>
      %c0_30 = arith.constant 0 : index
      %c0_31 = arith.constant 0 : index
      %51 = vector.load %arg9[%c0_30, %c0_31] : memref<128x1xf32, #tpu.memory_space<vmem>>, vector<128x1xf32>
      tpu.vector_store %arg9[%c0_30, %c0_31], %50 {strides = array<i32>} : memref<128x1xf32, #tpu.memory_space<vmem>>, vector<128x1xf32>,
    } else {
    }
    %c0_17 = arith.constant 0 : index
    %c0_18 = arith.constant 0 : index
    %35 = vector.load %arg8[%c0_17, %c0_18] : memref<128x1xf32, #tpu.memory_space<vmem>>, vector<128x1xf32>
    tpu.vector_store %arg8[%c0_17, %c0_18], %14 {strides = array<i32>} : memref<128x1xf32, #tpu.memory_space<vmem>>, vector<128x1xf32>,
    %c0_i32_19 = arith.constant 0 : i32
    %36 = arith.cmpi eq, %arg1, %c0_i32_19 : i32
    %37 = arith.extui %36 : i1 to i32
    %c0_i32_20 = arith.constant 0 : i32
    %38 = arith.cmpi ne, %37, %c0_i32_20 : i32
    scf.if %38 {
      %c0_21 = arith.constant 0 : index
      %c0_22 = arith.constant 0 : index
      %39 = vector.load %arg8[%c0_21, %c0_22] : memref<128x1xf32, #tpu.memory_space<vmem>>, vector<128x1xf32>
      %c0_23 = arith.constant 0 : index
      %c0_24 = arith.constant 0 : index
      %40 = vector.load %arg9[%c0_23, %c0_24] : memref<128x1xf32, #tpu.memory_space<vmem>>, vector<128x1xf32>
      %41 = math.log %40 : vector<128x1xf32>
      %42 = arith.addf %39, %41 : vector<128x1xf32>
      %c0_25 = arith.constant 0 : index
      %c0_26 = arith.constant 0 : index
      %43 = vector.load %arg4[%c0_25, %c0_26] : memref<128x1xf32, #tpu.memory_space<vmem>>, vector<128x1xf32>
      %cst_27 = arith.constant 1.000000e+00 : f32
      %44 = vector.broadcast %cst_27 : f32 to vector<128x1xf32>
      %45 = arith.maximumf %43, %44 : vector<128x1xf32>
      %c0_28 = arith.constant 0 : index
      %c0_29 = arith.constant 0 : index
      %46 = vector.load %arg10[%c0_28, %c0_29] : memref<128x1xf32, #tpu.memory_space<vmem>>, vector<128x1xf32>
      %47 = arith.mulf %43, %42 : vector<128x1xf32>
      %48 = arith.subf %46, %47 : vector<128x1xf32>
      %49 = arith.divf %48, %45 : vector<128x1xf32>
      %cst_30 = arith.constant 0.000000e+00 : f32
      %50 = vector.broadcast %cst_30 : f32 to vector<128x1xf32>
      %51 = arith.cmpf ogt, %43, %50 : vector<128x1xf32>
      %cst_31 = arith.constant -1.000000e+00 : f32
      %52 = vector.broadcast %cst_31 : f32 to vector<128x1xf32>
      %53 = arith.mulf %52, %49 : vector<128x1xf32>
      %cst_32 = arith.constant 0.000000e+00 : f32
      %54 = vector.broadcast %cst_32 : f32 to vector<128x1xf32>
      %55 = arith.select %51, %53, %54 : vector<128x1xi1>, vector<128x1xf32>
      %c0_33 = arith.constant 0 : index
      %c0_34 = arith.constant 0 : index
      %56 = vector.load %arg7[%c0_33, %c0_34] : memref<128x1xf32, #tpu.memory_space<vmem>>, vector<128x1xf32>
      tpu.vector_store %arg7[%c0_33, %c0_34], %55 {strides = array<i32>} : memref<128x1xf32, #tpu.memory_space<vmem>>, vector<128x1xf32>,
    } else {
    }
    return
  }
  func.func @transform_0(%arg0: i32, %arg1: i32) -> (i32, i32) {
    %c0_i32 = arith.constant 0 : i32
    %c0_i32_0 = arith.constant 0 : i32
    return %arg0, %c0_i32 : i32, i32
  }
  func.func @transform_1(%arg0: i32, %arg1: i32) -> (i32, i32) {
    %c0_i32 = arith.constant 0 : i32
    %c0_i32_0 = arith.constant 0 : i32
    return %c0_i32, %arg1 : i32, i32
  }
  func.func @transform_2(%arg0: i32, %arg1: i32) -> (i32, i32) {
    %c0_i32 = arith.constant 0 : i32
    %c0_i32_0 = arith.constant 0 : i32
    return %arg0, %c0_i32 : i32, i32
  }
  func.func @transform_3(%arg0: i32, %arg1: i32) -> (i32, i32) {
    %c0_i32 = arith.constant 0 : i32
    %c0_i32_0 = arith.constant 0 : i32
    return %arg0, %c0_i32 : i32, i32
  }
  func.func @transform_4(%arg0: i32, %arg1: i32) -> (i32, i32) {
    %c0_i32 = arith.constant 0 : i32
    %c0_i32_0 = arith.constant 0 : i32
    return %arg1, %c0_i32 : i32, i32
  }
  func.func @transform_5(%arg0: i32, %arg1: i32) -> (i32, i32) {
    %c0_i32 = arith.constant 0 : i32
    %c0_i32_0 = arith.constant 0 : i32
    return %arg0, %c0_i32 : i32, i32
  }
}

</mosaic_0001>

<llo_original>
// kernel: tpu_custom_call.1
$region0: #{tpu_custom_call.1}
  #allocation0 [shape = 'u32[]', space=smem, size = 0x4, offset = 0x4, fixed_abs, tag = 'smem constant byte address 0x4 - core index']
  #allocation1 [shape = 'u32[144,128]{1,0:T(1,128)}', space=vmem, size = 0x12000, scoped, tag = 'internal scratch']
  #allocation2 [shape = 'f32[128,1]{1,0:T(8,128)}', space=vmem, size = 0x10000, scoped, tag = 'scratch operand']
  #allocation3 [shape = 'f32[128,1]{1,0:T(8,128)}', space=vmem, size = 0x10000, scoped, tag = 'scratch operand']
  #allocation4 [shape = 'f32[128,1]{1,0:T(8,128)}', space=vmem, size = 0x10000, scoped, tag = 'scratch operand']
  %s0 = inlined_call_operand.vmem [shape: s32[128,1], index: 0, kind: input, shape index: {}]
  %s1 = inlined_call_operand.vmem [shape: s32[1,128], index: 1, kind: input, shape index: {}]
  %s2 = inlined_call_operand.vmem [shape: f32[128,1], index: 2, kind: input, shape index: {}]
  %s3 = inlined_call_operand.vmem [shape: f32[128,128], index: 3, kind: input, shape index: {}]
  %s4 = inlined_call_operand.vmem [shape: f32[128,128], index: 4, kind: input, shape index: {}]
  %s5 = inlined_call_operand.vmem [shape: f32[128,1], index: 5, kind: output, shape index: {}]
  %s6 = sld [smem:[#allocation0]]
  $region46: #{tpu_custom_call.1} parent=0
    _
  %s8 = ssub.s32 1, %s6
  %s9 = scalar_select 0, %s8, %s6
  // Predicated region
  $region2: #{tpu_custom_call.1} parent=0 // pred_check
    _
  $region3: #{tpu_custom_call.1} parent=0 // pred_check_branch
    %11 = sbr.rel (0) target = $region5
  $region4: #{tpu_custom_call.1} parent=0 // pred_region
    _
  $region5: #{tpu_custom_call.1} parent=0 // pred_fallthru
    _
  // Predicated region
  $region6: #{tpu_custom_call.1} parent=0 // pred_check
    _
  $region7: #{tpu_custom_call.1} parent=0 // pred_check_branch
    %13 = sbr.rel (0) target = $region9
  $region8: #{tpu_custom_call.1} parent=0 // pred_region
    _
  $region9: #{tpu_custom_call.1} parent=0 // pred_fallthru
    _
  // Predicated region
  $region10: #{tpu_custom_call.1} parent=0 // pred_check
    _
  $region11: #{tpu_custom_call.1} parent=0 // pred_check_branch
    %15 = sbr.rel (0) target = $region13
  $region12: #{tpu_custom_call.1} parent=0 // pred_region
    _
  $region13: #{tpu_custom_call.1} parent=0 // pred_fallthru
    _
  // Predicated region
  $region14: #{tpu_custom_call.1} parent=0 // pred_check
    _
  $region15: #{tpu_custom_call.1} parent=0 // pred_check_branch
    %17 = sbr.rel (0) target = $region17
  $region16: #{tpu_custom_call.1} parent=0 // pred_region
    _
  $region17: #{tpu_custom_call.1} parent=0 // pred_fallthru
    _
  // Predicated region
  $region18: #{tpu_custom_call.1} parent=0 // pred_check
    _
  $region19: #{tpu_custom_call.1} parent=0 // pred_check_branch
    %19 = sbr.rel (0) target = $region21
  $region20: #{tpu_custom_call.1} parent=0 // pred_region
    _
  $region21: #{tpu_custom_call.1} parent=0 // pred_fallthru
    _
  %p20 = scmp.eq.s32.totalorder 0, 0
  // Predicated region
  $region22: #{tpu_custom_call.1} parent=0 // pred_check
    %p21 = pneg %p20
  $region23: #{tpu_custom_call.1} parent=0 // pred_check_branch
    %23 = sbr.rel (%p21) target = $region25
  $region24: #{tpu_custom_call.1} parent=0 // pred_region
    %vm24 = vcmask 7168
    %25 = vst.msk [vmem:[#allocation2] sm:$0xff] %vm24, -inf
    %26 = vst.msk [vmem:[#allocation2 + $0x8] sm:$0xff] %vm24, -inf
    %27 = vst.msk [vmem:[#allocation2 + $0x10] sm:$0xff] %vm24, -inf
    %28 = vst.msk [vmem:[#allocation2 + $0x18] sm:$0xff] %vm24, -inf
    %29 = vst.msk [vmem:[#allocation2 + $0x20] sm:$0xff] %vm24, -inf
    %30 = vst.msk [vmem:[#allocation2 + $0x28] sm:$0xff] %vm24, -inf
    %31 = vst.msk [vmem:[#allocation2 + $0x30] sm:$0xff] %vm24, -inf
    %32 = vst.msk [vmem:[#allocation2 + $0x38] sm:$0xff] %vm24, -inf
    %33 = vst.msk [vmem:[#allocation2 + $0x40] sm:$0xff] %vm24, -inf
    %34 = vst.msk [vmem:[#allocation2 + $0x48] sm:$0xff] %vm24, -inf
    %35 = vst.msk [vmem:[#allocation2 + $0x50] sm:$0xff] %vm24, -inf
    %36 = vst.msk [vmem:[#allocation2 + $0x58] sm:$0xff] %vm24, -inf
    %37 = vst.msk [vmem:[#allocation2 + $0x60] sm:$0xff] %vm24, -inf
    %38 = vst.msk [vmem:[#allocation2 + $0x68] sm:$0xff] %vm24, -inf
    %39 = vst.msk [vmem:[#allocation2 + $0x70] sm:$0xff] %vm24, -inf
    %40 = vst.msk [vmem:[#allocation2 + $0x78] sm:$0xff] %vm24, -inf
    %41 = vst.msk [vmem:[#allocation3] sm:$0xff] %vm24, 0.0
    %42 = vst.msk [vmem:[#allocation3 + $0x8] sm:$0xff] %vm24, 0.0
    %43 = vst.msk [vmem:[#allocation3 + $0x10] sm:$0xff] %vm24, 0.0
    %44 = vst.msk [vmem:[#allocation3 + $0x18] sm:$0xff] %vm24, 0.0
    %45 = vst.msk [vmem:[#allocation3 + $0x20] sm:$0xff] %vm24, 0.0
    %46 = vst.msk [vmem:[#allocation3 + $0x28] sm:$0xff] %vm24, 0.0
    %47 = vst.msk [vmem:[#allocation3 + $0x30] sm:$0xff] %vm24, 0.0
    %48 = vst.msk [vmem:[#allocation3 + $0x38] sm:$0xff] %vm24, 0.0
    %49 = vst.msk [vmem:[#allocation3 + $0x40] sm:$0xff] %vm24, 0.0
    %50 = vst.msk [vmem:[#allocation3 + $0x48] sm:$0xff] %vm24, 0.0
    %51 = vst.msk [vmem:[#allocation3 + $0x50] sm:$0xff] %vm24, 0.0
    %52 = vst.msk [vmem:[#allocation3 + $0x58] sm:$0xff] %vm24, 0.0
    %53 = vst.msk [vmem:[#allocation3 + $0x60] sm:$0xff] %vm24, 0.0
    %54 = vst.msk [vmem:[#allocation3 + $0x68] sm:$0xff] %vm24, 0.0
    %55 = vst.msk [vmem:[#allocation3 + $0x70] sm:$0xff] %vm24, 0.0
    %56 = vst.msk [vmem:[#allocation3 + $0x78] sm:$0xff] %vm24, 0.0
    %57 = vst.msk [vmem:[#allocation4] sm:$0xff] %vm24, 0.0
    %58 = vst.msk [vmem:[#allocation4 + $0x8] sm:$0xff] %vm24, 0.0
    %59 = vst.msk [vmem:[#allocation4 + $0x10] sm:$0xff] %vm24, 0.0
    %60 = vst.msk [vmem:[#allocation4 + $0x18] sm:$0xff] %vm24, 0.0
    %61 = vst.msk [vmem:[#allocation4 + $0x20] sm:$0xff] %vm24, 0.0
    %62 = vst.msk [vmem:[#allocation4 + $0x28] sm:$0xff] %vm24, 0.0
    %63 = vst.msk [vmem:[#allocation4 + $0x30] sm:$0xff] %vm24, 0.0
    %64 = vst.msk [vmem:[#allocation4 + $0x38] sm:$0xff] %vm24, 0.0
    %65 = vst.msk [vmem:[#allocation4 + $0x40] sm:$0xff] %vm24, 0.0
    %66 = vst.msk [vmem:[#allocation4 + $0x48] sm:$0xff] %vm24, 0.0
    %67 = vst.msk [vmem:[#allocation4 + $0x50] sm:$0xff] %vm24, 0.0
    %68 = vst.msk [vmem:[#allocation4 + $0x58] sm:$0xff] %vm24, 0.0
    %69 = vst.msk [vmem:[#allocation4 + $0x60] sm:$0xff] %vm24, 0.0
    %70 = vst.msk [vmem:[#allocation4 + $0x68] sm:$0xff] %vm24, 0.0
    %71 = vst.msk [vmem:[#allocation4 + $0x70] sm:$0xff] %vm24, 0.0
    %72 = vst.msk [vmem:[#allocation4 + $0x78] sm:$0xff] %vm24, 0.0
  $region25: #{tpu_custom_call.1} parent=0 // pred_fallthru
    _
  %v73 = vld [vmem:[%s3] sm:$0xff]
  %v74 = vld [vmem:[%s3 + $0x8] sm:$0xff]
  %v75 = vld [vmem:[%s3 + $0x10] sm:$0xff]
  %v76 = vld [vmem:[%s3 + $0x18] sm:$0xff]
  %v77 = vld [vmem:[%s3 + $0x20] sm:$0xff]
  %v78 = vld [vmem:[%s3 + $0x28] sm:$0xff]
  %v79 = vld [vmem:[%s3 + $0x30] sm:$0xff]
  %v80 = vld [vmem:[%s3 + $0x38] sm:$0xff]
  %v81 = vld [vmem:[%s3 + $0x40] sm:$0xff]
  %v82 = vld [vmem:[%s3 + $0x48] sm:$0xff]
  %v83 = vld [vmem:[%s3 + $0x50] sm:$0xff]
  %v84 = vld [vmem:[%s3 + $0x58] sm:$0xff]
  %v85 = vld [vmem:[%s3 + $0x60] sm:$0xff]
  %v86 = vld [vmem:[%s3 + $0x68] sm:$0xff]
  %v87 = vld [vmem:[%s3 + $0x70] sm:$0xff]
  %v88 = vld [vmem:[%s3 + $0x78] sm:$0xff]
  %v89 = vld [vmem:[%s4] sm:$0xff]
  %v90 = vld [vmem:[%s4 + $0x8] sm:$0xff]
  %v91 = vld [vmem:[%s4 + $0x10] sm:$0xff]
  %v92 = vld [vmem:[%s4 + $0x18] sm:$0xff]
  %v93 = vld [vmem:[%s4 + $0x20] sm:$0xff]
  %v94 = vld [vmem:[%s4 + $0x28] sm:$0xff]
  %v95 = vld [vmem:[%s4 + $0x30] sm:$0xff]
  %v96 = vld [vmem:[%s4 + $0x38] sm:$0xff]
  %v97 = vld [vmem:[%s4 + $0x40] sm:$0xff]
  %v98 = vld [vmem:[%s4 + $0x48] sm:$0xff]
  %v99 = vld [vmem:[%s4 + $0x50] sm:$0xff]
  %v100 = vld [vmem:[%s4 + $0x58] sm:$0xff]
  %v101 = vld [vmem:[%s4 + $0x60] sm:$0xff]
  %v102 = vld [vmem:[%s4 + $0x68] sm:$0xff]
  %v103 = vld [vmem:[%s4 + $0x70] sm:$0xff]
  %v104 = vld [vmem:[%s4 + $0x78] sm:$0xff]
  %105 = vmatprep.subr.mxu0 0.0
  %106 = vmatpush1.xpose.msra.mxu0 %v89
  %107 = vmatprep.subr.mxu0 0.0
  %108 = vmatpush1.xpose.msra.mxu0 %v90
  %109 = vmatprep.subr.mxu0 0.0
  %110 = vmatpush1.xpose.msra.mxu0 %v91
  %111 = vmatprep.subr.mxu0 0.0
  %112 = vmatpush1.xpose.msra.mxu0 %v92
  %113 = vmatprep.subr.mxu0 0.0
  %114 = vmatpush1.xpose.msra.mxu0 %v93
  %115 = vmatprep.subr.mxu0 0.0
  %116 = vmatpush1.xpose.msra.mxu0 %v94
  %117 = vmatprep.subr.mxu0 0.0
  %118 = vmatpush1.xpose.msra.mxu0 %v95
  %119 = vmatprep.subr.mxu0 0.0
  %120 = vmatpush1.xpose.msra.mxu0 %v96
  %121 = vmatprep.subr.mxu0 0.0
  %122 = vmatpush1.xpose.msra.mxu0 %v97
  %123 = vmatprep.subr.mxu0 0.0
  %124 = vmatpush1.xpose.msra.mxu0 %v98
  %125 = vmatprep.subr.mxu0 0.0
  %126 = vmatpush1.xpose.msra.mxu0 %v99
  %127 = vmatprep.subr.mxu0 0.0
  %128 = vmatpush1.xpose.msra.mxu0 %v100
  %129 = vmatprep.subr.mxu0 0.0
  %130 = vmatpush1.xpose.msra.mxu0 %v101
  %131 = vmatprep.subr.mxu0 0.0
  %132 = vmatpush1.xpose.msra.mxu0 %v102
  %133 = vmatprep.subr.mxu0 0.0
  %134 = vmatpush1.xpose.msra.mxu0 %v103
  %135 = vmatprep.subr.mxu0 0.0
  %136 = vmatpush1.xpose.msra.mxu0 %v104
  %137 = vmatprep.subr.mxu0 0.0
  %138 = vmatpush1.xpose.msra.mxu0 0.0
  %139 = vmatprep.subr.mxu0 0.0
  %140 = vmatpush1.xpose.msra.mxu0 0.0
  %141 = vmatprep.subr.mxu0 0.0
  %142 = vmatpush1.xpose.msra.mxu0 0.0
  %143 = vmatprep.subr.mxu0 0.0
  %144 = vmatpush1.xpose.msra.mxu0 0.0
  %145 = vmatprep.subr.mxu0 0.0
  %146 = vmatpush1.xpose.msra.mxu0 0.0
  %147 = vmatprep.subr.mxu0 0.0
  %148 = vmatpush1.xpose.msra.mxu0 0.0
  %149 = vmatprep.subr.mxu0 0.0
  %150 = vmatpush1.xpose.msra.mxu0 0.0
  %151 = vmatprep.subr.mxu0 0.0
  %152 = vmatpush1.xpose.msra.mxu0 0.0
  %153 = vmatprep.subr.mxu0 0.0
  %154 = vmatpush1.xpose.msra.mxu0 0.0
  %155 = vmatprep.subr.mxu0 0.0
  %156 = vmatpush1.xpose.msra.mxu0 0.0
  %157 = vmatprep.subr.mxu0 0.0
  %158 = vmatpush1.xpose.msra.mxu0 0.0
  %159 = vmatprep.subr.mxu0 0.0
  %160 = vmatpush1.xpose.msra.mxu0 0.0
  %161 = vmatprep.subr.mxu0 0.0
  %162 = vmatpush1.xpose.msra.mxu0 0.0
  %163 = vmatprep.subr.mxu0 0.0
  %164 = vmatpush1.xpose.msra.mxu0 0.0
  %165 = vmatprep.subr.mxu0 0.0
  %166 = vmatpush1.xpose.msra.mxu0 0.0
  %167 = vmatprep.subr.mxu0 0.0
  %168 = vmatpush1.xpose.msra.mxu0 0.0
  %169 = vmatprep.mubr.f32.mxu0 0.0
  %170 = vmatmul.mubr.f32.gmra.mrb[0].mxu0 %v73
  %v171 = vpop.f32.mrb[0].mxu0
  %v172 = vadd.f32 0.0, %v171
  %v173 = vpop.f32.mrb[0].mxu0
  %174 = vmatprep.mubr.f32.mxu0 0.0
  %175 = vmatmul.mubr.f32.gmra.mrb[0].mxu0 %v74
  %v176 = vpop.f32.mrb[0].mxu0
  %v177 = vadd.f32 0.0, %v176
  %v178 = vpop.f32.mrb[0].mxu0
  %179 = vmatprep.mubr.f32.mxu0 0.0
  %180 = vmatmul.mubr.f32.gmra.mrb[0].mxu0 %v75
  %v181 = vpop.f32.mrb[0].mxu0
  %v182 = vadd.f32 0.0, %v181
  %v183 = vpop.f32.mrb[0].mxu0
  %184 = vmatprep.mubr.f32.mxu0 0.0
  %185 = vmatmul.mubr.f32.gmra.mrb[0].mxu0 %v76
  %v186 = vpop.f32.mrb[0].mxu0
  %v187 = vadd.f32 0.0, %v186
  %v188 = vpop.f32.mrb[0].mxu0
  %189 = vmatprep.mubr.f32.mxu0 0.0
  %190 = vmatmul.mubr.f32.gmra.mrb[0].mxu0 %v77
  %v191 = vpop.f32.mrb[0].mxu0
  %v192 = vadd.f32 0.0, %v191
  %v193 = vpop.f32.mrb[0].mxu0
  %194 = vmatprep.mubr.f32.mxu0 0.0
  %195 = vmatmul.mubr.f32.gmra.mrb[0].mxu0 %v78
  %v196 = vpop.f32.mrb[0].mxu0
  %v197 = vadd.f32 0.0, %v196
  %v198 = vpop.f32.mrb[0].mxu0
  %199 = vmatprep.mubr.f32.mxu0 0.0
  %200 = vmatmul.mubr.f32.gmra.mrb[0].mxu0 %v79
  %v201 = vpop.f32.mrb[0].mxu0
  %v202 = vadd.f32 0.0, %v201
  %v203 = vpop.f32.mrb[0].mxu0
  %204 = vmatprep.mubr.f32.mxu0 0.0
  %205 = vmatmul.mubr.f32.gmra.mrb[0].mxu0 %v80
  %v206 = vpop.f32.mrb[0].mxu0
  %v207 = vadd.f32 0.0, %v206
  %v208 = vpop.f32.mrb[0].mxu0
  %209 = vmatprep.mubr.f32.mxu0 0.0
  %210 = vmatmul.mubr.f32.gmra.mrb[0].mxu0 %v81
  %v211 = vpop.f32.mrb[0].mxu0
  %v212 = vadd.f32 0.0, %v211
  %v213 = vpop.f32.mrb[0].mxu0
  %214 = vmatprep.mubr.f32.mxu0 0.0
  %215 = vmatmul.mubr.f32.gmra.mrb[0].mxu0 %v82
  %v216 = vpop.f32.mrb[0].mxu0
  %v217 = vadd.f32 0.0, %v216
  %v218 = vpop.f32.mrb[0].mxu0
  %219 = vmatprep.mubr.f32.mxu0 0.0
  %220 = vmatmul.mubr.f32.gmra.mrb[0].mxu0 %v83
  %v221 = vpop.f32.mrb[0].mxu0
  %v222 = vadd.f32 0.0, %v221
  %v223 = vpop.f32.mrb[0].mxu0
  %224 = vmatprep.mubr.f32.mxu0 0.0
  %225 = vmatmul.mubr.f32.gmra.mrb[0].mxu0 %v84
  %v226 = vpop.f32.mrb[0].mxu0
  %v227 = vadd.f32 0.0, %v226
  %v228 = vpop.f32.mrb[0].mxu0
  %229 = vmatprep.mubr.f32.mxu0 0.0
  %230 = vmatmul.mubr.f32.gmra.mrb[0].mxu0 %v85
  %v231 = vpop.f32.mrb[0].mxu0
  %v232 = vadd.f32 0.0, %v231
  %v233 = vpop.f32.mrb[0].mxu0
  %234 = vmatprep.mubr.f32.mxu0 0.0
  %235 = vmatmul.mubr.f32.gmra.mrb[0].mxu0 %v86
  %v236 = vpop.f32.mrb[0].mxu0
  %v237 = vadd.f32 0.0, %v236
  %v238 = vpop.f32.mrb[0].mxu0
  %239 = vmatprep.mubr.f32.mxu0 0.0
  %240 = vmatmul.mubr.f32.gmra.mrb[0].mxu0 %v87
  %v241 = vpop.f32.mrb[0].mxu0
  %v242 = vadd.f32 0.0, %v241
  %v243 = vpop.f32.mrb[0].mxu0
  %244 = vmatprep.mubr.f32.mxu0 0.0
  %245 = vmatmul.mubr.f32.gmra.mrb[0].mxu0 %v88
  %v246 = vpop.f32.mrb[0].mxu0
  %v247 = vadd.f32 0.0, %v246
  %v248 = vpop.f32.mrb[0].mxu0
  %249 = vdwg.mxu0
  %v250 = vld [vmem:[%s0] sm:$0xff]
  %v251 = vld [vmem:[%s0 + $0x8] sm:$0xff]
  %v252 = vld [vmem:[%s0 + $0x10] sm:$0xff]
  %v253 = vld [vmem:[%s0 + $0x18] sm:$0xff]
  %v254 = vld [vmem:[%s0 + $0x20] sm:$0xff]
  %v255 = vld [vmem:[%s0 + $0x28] sm:$0xff]
  %v256 = vld [vmem:[%s0 + $0x30] sm:$0xff]
  %v257 = vld [vmem:[%s0 + $0x38] sm:$0xff]
  %v258 = vld [vmem:[%s0 + $0x40] sm:$0xff]
  %v259 = vld [vmem:[%s0 + $0x48] sm:$0xff]
  %v260 = vld [vmem:[%s0 + $0x50] sm:$0xff]
  %v261 = vld [vmem:[%s0 + $0x58] sm:$0xff]
  %v262 = vld [vmem:[%s0 + $0x60] sm:$0xff]
  %v263 = vld [vmem:[%s0 + $0x68] sm:$0xff]
  %v264 = vld [vmem:[%s0 + $0x70] sm:$0xff]
  %v265 = vld [vmem:[%s0 + $0x78] sm:$0xff]
  %v266 = vld [vmem:[%s1] sm:$0x1]
  %267 = vset.pattern.permute.xlu0 0
  %268 = vperm.xlu0 %267, %v250
  %v269 = vpop.permute.xlu0 %268
  %270 = vset.pattern.permute.xlu0 0
  %271 = vperm.xlu0 %270, %v251
  %v272 = vpop.permute.xlu0 %271
  %273 = vset.pattern.permute.xlu0 0
  %274 = vperm.xlu0 %273, %v252
  %v275 = vpop.permute.xlu0 %274
  %276 = vset.pattern.permute.xlu0 0
  %277 = vperm.xlu0 %276, %v253
  %v278 = vpop.permute.xlu0 %277
  %279 = vset.pattern.permute.xlu0 0
  %280 = vperm.xlu0 %279, %v254
  %v281 = vpop.permute.xlu0 %280
  %282 = vset.pattern.permute.xlu0 0
  %283 = vperm.xlu0 %282, %v255
  %v284 = vpop.permute.xlu0 %283
  %285 = vset.pattern.permute.xlu0 0
  %286 = vperm.xlu0 %285, %v256
  %v287 = vpop.permute.xlu0 %286
  %288 = vset.pattern.permute.xlu0 0
  %289 = vperm.xlu0 %288, %v257
  %v290 = vpop.permute.xlu0 %289
  %291 = vset.pattern.permute.xlu0 0
  %292 = vperm.xlu0 %291, %v258
  %v293 = vpop.permute.xlu0 %292
  %294 = vset.pattern.permute.xlu0 0
  %295 = vperm.xlu0 %294, %v259
  %v296 = vpop.permute.xlu0 %295
  %297 = vset.pattern.permute.xlu0 0
  %298 = vperm.xlu0 %297, %v260
  %v299 = vpop.permute.xlu0 %298
  %300 = vset.pattern.permute.xlu0 0
  %301 = vperm.xlu0 %300, %v261
  %v302 = vpop.permute.xlu0 %301
  %303 = vset.pattern.permute.xlu0 0
  %304 = vperm.xlu0 %303, %v262
  %v305 = vpop.permute.xlu0 %304
  %306 = vset.pattern.permute.xlu0 0
  %307 = vperm.xlu0 %306, %v263
  %v308 = vpop.permute.xlu0 %307
  %309 = vset.pattern.permute.xlu0 0
  %310 = vperm.xlu0 %309, %v264
  %v311 = vpop.permute.xlu0 %310
  %312 = vset.pattern.permute.xlu0 0
  %313 = vperm.xlu0 %312, %v265
  %v314 = vpop.permute.xlu0 %313
  %v315 = vlaneseq
  %v316 = vshrl.u32 %v315, 7
  %v317 = vsub.s32 0, %v316
  %v318 = vrot.slane %v266, %v317
  %vm319 = vcmp.eq.s32.totalorder %v269, %v318
  %vm320 = vcmp.eq.s32.totalorder %v272, %v318
  %vm321 = vcmp.eq.s32.totalorder %v275, %v318
  %vm322 = vcmp.eq.s32.totalorder %v278, %v318
  %vm323 = vcmp.eq.s32.totalorder %v281, %v318
  %vm324 = vcmp.eq.s32.totalorder %v284, %v318
  %vm325 = vcmp.eq.s32.totalorder %v287, %v318
  %vm326 = vcmp.eq.s32.totalorder %v290, %v318
  %vm327 = vcmp.eq.s32.totalorder %v293, %v318
  %vm328 = vcmp.eq.s32.totalorder %v296, %v318
  %vm329 = vcmp.eq.s32.totalorder %v299, %v318
  %vm330 = vcmp.eq.s32.totalorder %v302, %v318
  %vm331 = vcmp.eq.s32.totalorder %v305, %v318
  %vm332 = vcmp.eq.s32.totalorder %v308, %v318
  %vm333 = vcmp.eq.s32.totalorder %v311, %v318
  %vm334 = vcmp.eq.s32.totalorder %v314, %v318
  %v335 = vld [vmem:[#allocation2] sm:$0xff]
  %v336 = vld [vmem:[#allocation2 + $0x8] sm:$0xff]
  %v337 = vld [vmem:[#allocation2 + $0x10] sm:$0xff]
  %v338 = vld [vmem:[#allocation2 + $0x18] sm:$0xff]
  %v339 = vld [vmem:[#allocation2 + $0x20] sm:$0xff]
  %v340 = vld [vmem:[#allocation2 + $0x28] sm:$0xff]
  %v341 = vld [vmem:[#allocation2 + $0x30] sm:$0xff]
  %v342 = vld [vmem:[#allocation2 + $0x38] sm:$0xff]
  %v343 = vld [vmem:[#allocation2 + $0x40] sm:$0xff]
  %v344 = vld [vmem:[#allocation2 + $0x48] sm:$0xff]
  %v345 = vld [vmem:[#allocation2 + $0x50] sm:$0xff]
  %v346 = vld [vmem:[#allocation2 + $0x58] sm:$0xff]
  %v347 = vld [vmem:[#allocation2 + $0x60] sm:$0xff]
  %v348 = vld [vmem:[#allocation2 + $0x68] sm:$0xff]
  %v349 = vld [vmem:[#allocation2 + $0x70] sm:$0xff]
  %v350 = vld [vmem:[#allocation2 + $0x78] sm:$0xff]
  %351 = vmax.xlane.f32.xlu0 %v172
  %v352 = vpop.xlane.xlu0 %351
  %353 = vmax.xlane.f32.xlu0 %v177
  %v354 = vpop.xlane.xlu0 %353
  %355 = vmax.xlane.f32.xlu0 %v182
  %v356 = vpop.xlane.xlu0 %355
  %357 = vmax.xlane.f32.xlu0 %v187
  %v358 = vpop.xlane.xlu0 %357
  %359 = vmax.xlane.f32.xlu0 %v192
  %v360 = vpop.xlane.xlu0 %359
  %361 = vmax.xlane.f32.xlu0 %v197
  %v362 = vpop.xlane.xlu0 %361
  %363 = vmax.xlane.f32.xlu0 %v202
  %v364 = vpop.xlane.xlu0 %363
  %365 = vmax.xlane.f32.xlu0 %v207
  %v366 = vpop.xlane.xlu0 %365
  %367 = vmax.xlane.f32.xlu0 %v212
  %v368 = vpop.xlane.xlu0 %367
  %369 = vmax.xlane.f32.xlu0 %v217
  %v370 = vpop.xlane.xlu0 %369
  %371 = vmax.xlane.f32.xlu0 %v222
  %v372 = vpop.xlane.xlu0 %371
  %373 = vmax.xlane.f32.xlu0 %v227
  %v374 = vpop.xlane.xlu0 %373
  %375 = vmax.xlane.f32.xlu0 %v232
  %v376 = vpop.xlane.xlu0 %375
  %377 = vmax.xlane.f32.xlu0 %v237
  %v378 = vpop.xlane.xlu0 %377
  %379 = vmax.xlane.f32.xlu0 %v242
  %v380 = vpop.xlane.xlu0 %379
  %381 = vmax.xlane.f32.xlu0 %v247
  %v382 = vpop.xlane.xlu0 %381
  %v383 = vmax.f32 %v335, %v352
  %v384 = vmax.f32 %v336, %v354
  %v385 = vmax.f32 %v337, %v356
  %v386 = vmax.f32 %v338, %v358
  %v387 = vmax.f32 %v339, %v360
  %v388 = vmax.f32 %v340, %v362
  %v389 = vmax.f32 %v341, %v364
  %v390 = vmax.f32 %v342, %v366
  %v391 = vmax.f32 %v343, %v368
  %v392 = vmax.f32 %v344, %v370
  %v393 = vmax.f32 %v345, %v372
  %v394 = vmax.f32 %v346, %v374
  %v395 = vmax.f32 %v347, %v376
  %v396 = vmax.f32 %v348, %v378
  %v397 = vmax.f32 %v349, %v380
  %v398 = vmax.f32 %v350, %v382
  %v399 = vsub.f32 %v335, %v383
  %v400 = vsub.f32 %v336, %v384
  %v401 = vsub.f32 %v337, %v385
  %v402 = vsub.f32 %v338, %v386
  %v403 = vsub.f32 %v339, %v387
  %v404 = vsub.f32 %v340, %v388
  %v405 = vsub.f32 %v341, %v389
  %v406 = vsub.f32 %v342, %v390
  %v407 = vsub.f32 %v343, %v391
  %v408 = vsub.f32 %v344, %v392
  %v409 = vsub.f32 %v345, %v393
  %v410 = vsub.f32 %v346, %v394
  %v411 = vsub.f32 %v347, %v395
  %v412 = vsub.f32 %v348, %v396
  %v413 = vsub.f32 %v349, %v397
  %v414 = vsub.f32 %v350, %v398
  %v415 = vmul.f32 %v399, 1.442695
  %v416 = vpow.pop %v415
  %v417 = vmul.f32 %v400, 1.442695
  %v418 = vpow.pop %v417
  %v419 = vmul.f32 %v401, 1.442695
  %v420 = vpow.pop %v419
  %v421 = vmul.f32 %v402, 1.442695
  %v422 = vpow.pop %v421
  %v423 = vmul.f32 %v403, 1.442695
  %v424 = vpow.pop %v423
  %v425 = vmul.f32 %v404, 1.442695
  %v426 = vpow.pop %v425
  %v427 = vmul.f32 %v405, 1.442695
  %v428 = vpow.pop %v427
  %v429 = vmul.f32 %v406, 1.442695
  %v430 = vpow.pop %v429
  %v431 = vmul.f32 %v407, 1.442695
  %v432 = vpow.pop %v431
  %v433 = vmul.f32 %v408, 1.442695
  %v434 = vpow.pop %v433
  %v435 = vmul.f32 %v409, 1.442695
  %v436 = vpow.pop %v435
  %v437 = vmul.f32 %v410, 1.442695
  %v438 = vpow.pop %v437
  %v439 = vmul.f32 %v411, 1.442695
  %v440 = vpow.pop %v439
  %v441 = vmul.f32 %v412, 1.442695
  %v442 = vpow.pop %v441
  %v443 = vmul.f32 %v413, 1.442695
  %v444 = vpow.pop %v443
  %v445 = vmul.f32 %v414, 1.442695
  %v446 = vpow.pop %v445
  %448 = vset.pattern.permute.xlu0 0
  %449 = vperm.xlu0 %448, %v383
  %v450 = vpop.permute.xlu0 %449
  %453 = vset.pattern.permute.xlu0 0
  %454 = vperm.xlu0 %453, %v384
  %v455 = vpop.permute.xlu0 %454
  %458 = vset.pattern.permute.xlu0 0
  %459 = vperm.xlu0 %458, %v385
  %v460 = vpop.permute.xlu0 %459
  %463 = vset.pattern.permute.xlu0 0
  %464 = vperm.xlu0 %463, %v386
  %v465 = vpop.permute.xlu0 %464
  %468 = vset.pattern.permute.xlu0 0
  %469 = vperm.xlu0 %468, %v387
  %v470 = vpop.permute.xlu0 %469
  %473 = vset.pattern.permute.xlu0 0
  %474 = vperm.xlu0 %473, %v388
  %v475 = vpop.permute.xlu0 %474
  %478 = vset.pattern.permute.xlu0 0
  %479 = vperm.xlu0 %478, %v389
  %v480 = vpop.permute.xlu0 %479
  %483 = vset.pattern.permute.xlu0 0
  %484 = vperm.xlu0 %483, %v390
  %v485 = vpop.permute.xlu0 %484
  %488 = vset.pattern.permute.xlu0 0
  %489 = vperm.xlu0 %488, %v391
  %v490 = vpop.permute.xlu0 %489
  %493 = vset.pattern.permute.xlu0 0
  %494 = vperm.xlu0 %493, %v392
  %v495 = vpop.permute.xlu0 %494
  %498 = vset.pattern.permute.xlu0 0
  %499 = vperm.xlu0 %498, %v393
  %v500 = vpop.permute.xlu0 %499
  %503 = vset.pattern.permute.xlu0 0
  %504 = vperm.xlu0 %503, %v394
  %v505 = vpop.permute.xlu0 %504
  %508 = vset.pattern.permute.xlu0 0
  %509 = vperm.xlu0 %508, %v395
  %v510 = vpop.permute.xlu0 %509
  %513 = vset.pattern.permute.xlu0 0
  %514 = vperm.xlu0 %513, %v396
  %v515 = vpop.permute.xlu0 %514
  %518 = vset.pattern.permute.xlu0 0
  %519 = vperm.xlu0 %518, %v397
  %v520 = vpop.permute.xlu0 %519
  %523 = vset.pattern.permute.xlu0 0
  %524 = vperm.xlu0 %523, %v398
  %v525 = vpop.permute.xlu0 %524
  %v527 = vsub.f32 %v172, %v450
  %v528 = vsub.f32 %v177, %v455
  %v529 = vsub.f32 %v182, %v460
  %v530 = vsub.f32 %v187, %v465
  %v531 = vsub.f32 %v192, %v470
  %v532 = vsub.f32 %v197, %v475
  %v533 = vsub.f32 %v202, %v480
  %v534 = vsub.f32 %v207, %v485
  %v535 = vsub.f32 %v212, %v490
  %v536 = vsub.f32 %v217, %v495
  %v537 = vsub.f32 %v222, %v500
  %v538 = vsub.f32 %v227, %v505
  %v539 = vsub.f32 %v232, %v510
  %v540 = vsub.f32 %v237, %v515
  %v541 = vsub.f32 %v242, %v520
  %v542 = vsub.f32 %v247, %v525
  %v543 = vmul.f32 %v527, 1.442695
  %v544 = vpow.pop %v543
  %v545 = vmul.f32 %v528, 1.442695
  %v546 = vpow.pop %v545
  %v547 = vmul.f32 %v529, 1.442695
  %v548 = vpow.pop %v547
  %v549 = vmul.f32 %v530, 1.442695
  %v550 = vpow.pop %v549
  %v551 = vmul.f32 %v531, 1.442695
  %v552 = vpow.pop %v551
  %v553 = vmul.f32 %v532, 1.442695
  %v554 = vpow.pop %v553
  %v555 = vmul.f32 %v533, 1.442695
  %v556 = vpow.pop %v555
  %v557 = vmul.f32 %v534, 1.442695
  %v558 = vpow.pop %v557
  %v559 = vmul.f32 %v535, 1.442695
  %v560 = vpow.pop %v559
  %v561 = vmul.f32 %v536, 1.442695
  %v562 = vpow.pop %v561
  %v563 = vmul.f32 %v537, 1.442695
  %v564 = vpow.pop %v563
  %v565 = vmul.f32 %v538, 1.442695
  %v566 = vpow.pop %v565
  %v567 = vmul.f32 %v539, 1.442695
  %v568 = vpow.pop %v567
  %v569 = vmul.f32 %v540, 1.442695
  %v570 = vpow.pop %v569
  %v571 = vmul.f32 %v541, 1.442695
  %v572 = vpow.pop %v571
  %v573 = vmul.f32 %v542, 1.442695
  %v574 = vpow.pop %v573
  %s575 = smul.u32 0, 128
  %s576 = smul.u32 0, 128
  %s577 = sadd.s32 %s576, 128
  %p578 = scmp.lt.s32.totalorder %s575, %s577
  %s579 = sadd.s32 %s575, 128
  %p580 = scmp.lt.s32.totalorder %s576, %s579
  %p581 = pnand %p578, %p580
  %p582 = pneg %p581
  %p583 = scmp.gt.s32.totalorder %s577, 16
  %p584 = por %p582, %p583
  // Predicated region
  $region26: #{tpu_custom_call.1} parent=0 // pred_check
    %p585 = pneg %p584
  $region27: #{tpu_custom_call.1} parent=0 // pred_check_branch
    %587 = sbr.rel (%p585) target = $region29
  $region28: #{tpu_custom_call.1} parent=0 // pred_region
    %v588 = vlaneseq
    %v589 = vshrl.u32 %v588, 7
    %v590 = vadd.s32 %v589, 8
    %v591 = vadd.s32 %v589, 16
    %v592 = vadd.s32 %v589, 24
    %v593 = vadd.s32 %v589, 32
    %v594 = vadd.s32 %v589, 40
    %v595 = vadd.s32 %v589, 48
    %v596 = vadd.s32 %v589, 56
    %v597 = vadd.s32 %v589, 64
    %v598 = vadd.s32 %v589, 72
    %v599 = vadd.s32 %v589, 80
    %v600 = vadd.s32 %v589, 88
    %v601 = vadd.s32 %v589, 96
    %v602 = vadd.s32 %v589, 104
    %v603 = vadd.s32 %v589, 112
    %v604 = vadd.s32 %v589, 120
    %v605 = vstv %s575
    %v606 = vadd.s32 %v605, %v589
    %v607 = vadd.s32 %v605, %v590
    %v608 = vadd.s32 %v605, %v591
    %v609 = vadd.s32 %v605, %v592
    %v610 = vadd.s32 %v605, %v593
    %v611 = vadd.s32 %v605, %v594
    %v612 = vadd.s32 %v605, %v595
    %v613 = vadd.s32 %v605, %v596
    %v614 = vadd.s32 %v605, %v597
    %v615 = vadd.s32 %v605, %v598
    %v616 = vadd.s32 %v605, %v599
    %v617 = vadd.s32 %v605, %v600
    %v618 = vadd.s32 %v605, %v601
    %v619 = vadd.s32 %v605, %v602
    %v620 = vadd.s32 %v605, %v603
    %v621 = vadd.s32 %v605, %v604
    %v622 = vlaneseq
    %v623 = vand.u32 %v622, 127
    %v624 = vstv %s576
    %v625 = vadd.s32 %v624, %v623
    %vm626 = vcmp.ne.s32.totalorder %v606, %v625
    %vm627 = vcmp.ne.s32.totalorder %v607, %v625
    %vm628 = vcmp.ne.s32.totalorder %v608, %v625
    %vm629 = vcmp.ne.s32.totalorder %v609, %v625
    %vm630 = vcmp.ne.s32.totalorder %v610, %v625
    %vm631 = vcmp.ne.s32.totalorder %v611, %v625
    %vm632 = vcmp.ne.s32.totalorder %v612, %v625
    %vm633 = vcmp.ne.s32.totalorder %v613, %v625
    %vm634 = vcmp.ne.s32.totalorder %v614, %v625
    %vm635 = vcmp.ne.s32.totalorder %v615, %v625
    %vm636 = vcmp.ne.s32.totalorder %v616, %v625
    %vm637 = vcmp.ne.s32.totalorder %v617, %v625
    %vm638 = vcmp.ne.s32.totalorder %v618, %v625
    %vm639 = vcmp.ne.s32.totalorder %v619, %v625
    %vm640 = vcmp.ne.s32.totalorder %v620, %v625
    %vm641 = vcmp.ne.s32.totalorder %v621, %v625
    %vm642 = vcmp.lt.s32.totalorder %v625, 16
    %v643 = vsel %vm642, 1, 0
    %vm644 = vcmp.eq.s32.totalorder %v643, 1
    %vm645 = vmand %vm626, %vm644
    %vm646 = vmand %vm627, %vm644
    %vm647 = vmand %vm628, %vm644
    %vm648 = vmand %vm629, %vm644
    %vm649 = vmand %vm630, %vm644
    %vm650 = vmand %vm631, %vm644
    %vm651 = vmand %vm632, %vm644
    %vm652 = vmand %vm633, %vm644
    %vm653 = vmand %vm634, %vm644
    %vm654 = vmand %vm635, %vm644
    %vm655 = vmand %vm636, %vm644
    %vm656 = vmand %vm637, %vm644
    %vm657 = vmand %vm638, %vm644
    %vm658 = vmand %vm639, %vm644
    %vm659 = vmand %vm640, %vm644
    %vm660 = vmand %vm641, %vm644
    %vm661 = vmand %vm319, %vm645
    %vm662 = vmand %vm320, %vm646
    %vm663 = vmand %vm321, %vm647
    %vm664 = vmand %vm322, %vm648
    %vm665 = vmand %vm323, %vm649
    %vm666 = vmand %vm324, %vm650
    %vm667 = vmand %vm325, %vm651
    %vm668 = vmand %vm326, %vm652
    %vm669 = vmand %vm327, %vm653
    %vm670 = vmand %vm328, %vm654
    %vm671 = vmand %vm329, %vm655
    %vm672 = vmand %vm330, %vm656
    %vm673 = vmand %vm331, %vm657
    %vm674 = vmand %vm332, %vm658
    %vm675 = vmand %vm333, %vm659
    %vm676 = vmand %vm334, %vm660
    %v677 = vld [vmem:[#allocation4] sm:$0xff]
    %v678 = vld [vmem:[#allocation4 + $0x8] sm:$0xff]
    %v679 = vld [vmem:[#allocation4 + $0x10] sm:$0xff]
    %v680 = vld [vmem:[#allocation4 + $0x18] sm:$0xff]
    %v681 = vld [vmem:[#allocation4 + $0x20] sm:$0xff]
    %v682 = vld [vmem:[#allocation4 + $0x28] sm:$0xff]
    %v683 = vld [vmem:[#allocation4 + $0x30] sm:$0xff]
    %v684 = vld [vmem:[#allocation4 + $0x38] sm:$0xff]
    %v685 = vld [vmem:[#allocation4 + $0x40] sm:$0xff]
    %v686 = vld [vmem:[#allocation4 + $0x48] sm:$0xff]
    %v687 = vld [vmem:[#allocation4 + $0x50] sm:$0xff]
    %v688 = vld [vmem:[#allocation4 + $0x58] sm:$0xff]
    %v689 = vld [vmem:[#allocation4 + $0x60] sm:$0xff]
    %v690 = vld [vmem:[#allocation4 + $0x68] sm:$0xff]
    %v691 = vld [vmem:[#allocation4 + $0x70] sm:$0xff]
    %v692 = vld [vmem:[#allocation4 + $0x78] sm:$0xff]
    %v693 = vsel %vm661, %v172, 0.0
    %v694 = vsel %vm662, %v177, 0.0
    %v695 = vsel %vm663, %v182, 0.0
    %v696 = vsel %vm664, %v187, 0.0
    %v697 = vsel %vm665, %v192, 0.0
    %v698 = vsel %vm666, %v197, 0.0
    %v699 = vsel %vm667, %v202, 0.0
    %v700 = vsel %vm668, %v207, 0.0
    %v701 = vsel %vm669, %v212, 0.0
    %v702 = vsel %vm670, %v217, 0.0
    %v703 = vsel %vm671, %v222, 0.0
    %v704 = vsel %vm672, %v227, 0.0
    %v705 = vsel %vm673, %v232, 0.0
    %v706 = vsel %vm674, %v237, 0.0
    %v707 = vsel %vm675, %v242, 0.0
    %v708 = vsel %vm676, %v247, 0.0
    %709 = vadd.xlane.f32.xlu0 %v693
    %v710 = vpop.xlane.xlu0 %709
    %711 = vadd.xlane.f32.xlu0 %v694
    %v712 = vpop.xlane.xlu0 %711
    %713 = vadd.xlane.f32.xlu0 %v695
    %v714 = vpop.xlane.xlu0 %713
    %715 = vadd.xlane.f32.xlu0 %v696
    %v716 = vpop.xlane.xlu0 %715
    %717 = vadd.xlane.f32.xlu0 %v697
    %v718 = vpop.xlane.xlu0 %717
    %719 = vadd.xlane.f32.xlu0 %v698
    %v720 = vpop.xlane.xlu0 %719
    %721 = vadd.xlane.f32.xlu0 %v699
    %v722 = vpop.xlane.xlu0 %721
    %723 = vadd.xlane.f32.xlu0 %v700
    %v724 = vpop.xlane.xlu0 %723
    %725 = vadd.xlane.f32.xlu0 %v701
    %v726 = vpop.xlane.xlu0 %725
    %727 = vadd.xlane.f32.xlu0 %v702
    %v728 = vpop.xlane.xlu0 %727
    %729 = vadd.xlane.f32.xlu0 %v703
    %v730 = vpop.xlane.xlu0 %729
    %731 = vadd.xlane.f32.xlu0 %v704
    %v732 = vpop.xlane.xlu0 %731
    %733 = vadd.xlane.f32.xlu0 %v705
    %v734 = vpop.xlane.xlu0 %733
    %735 = vadd.xlane.f32.xlu0 %v706
    %v736 = vpop.xlane.xlu0 %735
    %737 = vadd.xlane.f32.xlu0 %v707
    %v738 = vpop.xlane.xlu0 %737
    %739 = vadd.xlane.f32.xlu0 %v708
    %v740 = vpop.xlane.xlu0 %739
    %v741 = vadd.f32 %v677, %v710
    %v742 = vadd.f32 %v678, %v712
    %v743 = vadd.f32 %v679, %v714
    %v744 = vadd.f32 %v680, %v716
    %v745 = vadd.f32 %v681, %v718
    %v746 = vadd.f32 %v682, %v720
    %v747 = vadd.f32 %v683, %v722
    %v748 = vadd.f32 %v684, %v724
    %v749 = vadd.f32 %v685, %v726
    %v750 = vadd.f32 %v686, %v728
    %v751 = vadd.f32 %v687, %v730
    %v752 = vadd.f32 %v688, %v732
    %v753 = vadd.f32 %v689, %v734
    %v754 = vadd.f32 %v690, %v736
    %v755 = vadd.f32 %v691, %v738
    %v756 = vadd.f32 %v692, %v740
    %vm757 = vcmask 7168
    %758 = vst.msk [vmem:[#allocation4] sm:$0xff] %vm757, %v741
    %759 = vst.msk [vmem:[#allocation4 + $0x8] sm:$0xff] %vm757, %v742
    %760 = vst.msk [vmem:[#allocation4 + $0x10] sm:$0xff] %vm757, %v743
    %761 = vst.msk [vmem:[#allocation4 + $0x18] sm:$0xff] %vm757, %v744
    %762 = vst.msk [vmem:[#allocation4 + $0x20] sm:$0xff] %vm757, %v745
    %763 = vst.msk [vmem:[#allocation4 + $0x28] sm:$0xff] %vm757, %v746
    %764 = vst.msk [vmem:[#allocation4 + $0x30] sm:$0xff] %vm757, %v747
    %765 = vst.msk [vmem:[#allocation4 + $0x38] sm:$0xff] %vm757, %v748
    %766 = vst.msk [vmem:[#allocation4 + $0x40] sm:$0xff] %vm757, %v749
    %767 = vst.msk [vmem:[#allocation4 + $0x48] sm:$0xff] %vm757, %v750
    %768 = vst.msk [vmem:[#allocation4 + $0x50] sm:$0xff] %vm757, %v751
    %769 = vst.msk [vmem:[#allocation4 + $0x58] sm:$0xff] %vm757, %v752
    %770 = vst.msk [vmem:[#allocation4 + $0x60] sm:$0xff] %vm757, %v753
    %771 = vst.msk [vmem:[#allocation4 + $0x68] sm:$0xff] %vm757, %v754
    %772 = vst.msk [vmem:[#allocation4 + $0x70] sm:$0xff] %vm757, %v755
    %773 = vst.msk [vmem:[#allocation4 + $0x78] sm:$0xff] %vm757, %v756
    %v774 = vld [vmem:[#allocation3] sm:$0xff]
    %v775 = vld [vmem:[#allocation3 + $0x8] sm:$0xff]
    %v776 = vld [vmem:[#allocation3 + $0x10] sm:$0xff]
    %v777 = vld [vmem:[#allocation3 + $0x18] sm:$0xff]
    %v778 = vld [vmem:[#allocation3 + $0x20] sm:$0xff]
    %v779 = vld [vmem:[#allocation3 + $0x28] sm:$0xff]
    %v780 = vld [vmem:[#allocation3 + $0x30] sm:$0xff]
    %v781 = vld [vmem:[#allocation3 + $0x38] sm:$0xff]
    %v782 = vld [vmem:[#allocation3 + $0x40] sm:$0xff]
    %v783 = vld [vmem:[#allocation3 + $0x48] sm:$0xff]
    %v784 = vld [vmem:[#allocation3 + $0x50] sm:$0xff]
    %v785 = vld [vmem:[#allocation3 + $0x58] sm:$0xff]
    %v786 = vld [vmem:[#allocation3 + $0x60] sm:$0xff]
    %v787 = vld [vmem:[#allocation3 + $0x68] sm:$0xff]
    %v788 = vld [vmem:[#allocation3 + $0x70] sm:$0xff]
    %v789 = vld [vmem:[#allocation3 + $0x78] sm:$0xff]
    %v790 = vmul.f32 %v416, %v774
    %v791 = vmul.f32 %v418, %v775
    %v792 = vmul.f32 %v420, %v776
    %v793 = vmul.f32 %v422, %v777
    %v794 = vmul.f32 %v424, %v778
    %v795 = vmul.f32 %v426, %v779
    %v796 = vmul.f32 %v428, %v780
    %v797 = vmul.f32 %v430, %v781
    %v798 = vmul.f32 %v432, %v782
    %v799 = vmul.f32 %v434, %v783
    %v800 = vmul.f32 %v436, %v784
    %v801 = vmul.f32 %v438, %v785
    %v802 = vmul.f32 %v440, %v786
    %v803 = vmul.f32 %v442, %v787
    %v804 = vmul.f32 %v444, %v788
    %v805 = vmul.f32 %v446, %v789
    %v806 = vsel %vm645, %v544, 0.0
    %v807 = vsel %vm646, %v546, 0.0
    %v808 = vsel %vm647, %v548, 0.0
    %v809 = vsel %vm648, %v550, 0.0
    %v810 = vsel %vm649, %v552, 0.0
    %v811 = vsel %vm650, %v554, 0.0
    %v812 = vsel %vm651, %v556, 0.0
    %v813 = vsel %vm652, %v558, 0.0
    %v814 = vsel %vm653, %v560, 0.0
    %v815 = vsel %vm654, %v562, 0.0
    %v816 = vsel %vm655, %v564, 0.0
    %v817 = vsel %vm656, %v566, 0.0
    %v818 = vsel %vm657, %v568, 0.0
    %v819 = vsel %vm658, %v570, 0.0
    %v820 = vsel %vm659, %v572, 0.0
    %v821 = vsel %vm660, %v574, 0.0
    %822 = vadd.xlane.f32.xlu0 %v806
    %v823 = vpop.xlane.xlu0 %822
    %824 = vadd.xlane.f32.xlu0 %v807
    %v825 = vpop.xlane.xlu0 %824
    %826 = vadd.xlane.f32.xlu0 %v808
    %v827 = vpop.xlane.xlu0 %826
    %828 = vadd.xlane.f32.xlu0 %v809
    %v829 = vpop.xlane.xlu0 %828
    %830 = vadd.xlane.f32.xlu0 %v810
    %v831 = vpop.xlane.xlu0 %830
    %832 = vadd.xlane.f32.xlu0 %v811
    %v833 = vpop.xlane.xlu0 %832
    %834 = vadd.xlane.f32.xlu0 %v812
    %v835 = vpop.xlane.xlu0 %834
    %836 = vadd.xlane.f32.xlu0 %v813
    %v837 = vpop.xlane.xlu0 %836
    %838 = vadd.xlane.f32.xlu0 %v814
    %v839 = vpop.xlane.xlu0 %838
    %840 = vadd.xlane.f32.xlu0 %v815
    %v841 = vpop.xlane.xlu0 %840
    %842 = vadd.xlane.f32.xlu0 %v816
    %v843 = vpop.xlane.xlu0 %842
    %844 = vadd.xlane.f32.xlu0 %v817
    %v845 = vpop.xlane.xlu0 %844
    %846 = vadd.xlane.f32.xlu0 %v818
    %v847 = vpop.xlane.xlu0 %846
    %848 = vadd.xlane.f32.xlu0 %v819
    %v849 = vpop.xlane.xlu0 %848
    %850 = vadd.xlane.f32.xlu0 %v820
    %v851 = vpop.xlane.xlu0 %850
    %852 = vadd.xlane.f32.xlu0 %v821
    %v853 = vpop.xlane.xlu0 %852
    %v854 = vadd.f32 %v790, %v823
    %v855 = vadd.f32 %v791, %v825
    %v856 = vadd.f32 %v792, %v827
    %v857 = vadd.f32 %v793, %v829
    %v858 = vadd.f32 %v794, %v831
    %v859 = vadd.f32 %v795, %v833
    %v860 = vadd.f32 %v796, %v835
    %v861 = vadd.f32 %v797, %v837
    %v862 = vadd.f32 %v798, %v839
    %v863 = vadd.f32 %v799, %v841
    %v864 = vadd.f32 %v800, %v843
    %v865 = vadd.f32 %v801, %v845
    %v866 = vadd.f32 %v802, %v847
    %v867 = vadd.f32 %v803, %v849
    %v868 = vadd.f32 %v804, %v851
    %v869 = vadd.f32 %v805, %v853
    %870 = vst.msk [vmem:[#allocation3] sm:$0xff] %vm757, %v854
    %871 = vst.msk [vmem:[#allocation3 + $0x8] sm:$0xff] %vm757, %v855
    %872 = vst.msk [vmem:[#allocation3 + $0x10] sm:$0xff] %vm757, %v856
    %873 = vst.msk [vmem:[#allocation3 + $0x18] sm:$0xff] %vm757, %v857
    %874 = vst.msk [vmem:[#allocation3 + $0x20] sm:$0xff] %vm757, %v858
    %875 = vst.msk [vmem:[#allocation3 + $0x28] sm:$0xff] %vm757, %v859
    %876 = vst.msk [vmem:[#allocation3 + $0x30] sm:$0xff] %vm757, %v860
    %877 = vst.msk [vmem:[#allocation3 + $0x38] sm:$0xff] %vm757, %v861
    %878 = vst.msk [vmem:[#allocation3 + $0x40] sm:$0xff] %vm757, %v862
    %879 = vst.msk [vmem:[#allocation3 + $0x48] sm:$0xff] %vm757, %v863
    %880 = vst.msk [vmem:[#allocation3 + $0x50] sm:$0xff] %vm757, %v864
    %881 = vst.msk [vmem:[#allocation3 + $0x58] sm:$0xff] %vm757, %v865
    %882 = vst.msk [vmem:[#allocation3 + $0x60] sm:$0xff] %vm757, %v866
    %883 = vst.msk [vmem:[#allocation3 + $0x68] sm:$0xff] %vm757, %v867
    %884 = vst.msk [vmem:[#allocation3 + $0x70] sm:$0xff] %vm757, %v868
    %885 = vst.msk [vmem:[#allocation3 + $0x78] sm:$0xff] %vm757, %v869
  $region29: #{tpu_custom_call.1} parent=0 // pred_fallthru
    _
  %p886 = pneg %p584
  // Predicated region
  $region30: #{tpu_custom_call.1} parent=0 // pred_check
    _
  $region31: #{tpu_custom_call.1} parent=0 // pred_check_branch
    %888 = sbr.rel (%p584) target = $region33
  $region32: #{tpu_custom_call.1} parent=0 // pred_region
    %v889 = vld [vmem:[#allocation4] sm:$0xff]
    %v890 = vld [vmem:[#allocation4 + $0x8] sm:$0xff]
    %v891 = vld [vmem:[#allocation4 + $0x10] sm:$0xff]
    %v892 = vld [vmem:[#allocation4 + $0x18] sm:$0xff]
    %v893 = vld [vmem:[#allocation4 + $0x20] sm:$0xff]
    %v894 = vld [vmem:[#allocation4 + $0x28] sm:$0xff]
    %v895 = vld [vmem:[#allocation4 + $0x30] sm:$0xff]
    %v896 = vld [vmem:[#allocation4 + $0x38] sm:$0xff]
    %v897 = vld [vmem:[#allocation4 + $0x40] sm:$0xff]
    %v898 = vld [vmem:[#allocation4 + $0x48] sm:$0xff]
    %v899 = vld [vmem:[#allocation4 + $0x50] sm:$0xff]
    %v900 = vld [vmem:[#allocation4 + $0x58] sm:$0xff]
    %v901 = vld [vmem:[#allocation4 + $0x60] sm:$0xff]
    %v902 = vld [vmem:[#allocation4 + $0x68] sm:$0xff]
    %v903 = vld [vmem:[#allocation4 + $0x70] sm:$0xff]
    %v904 = vld [vmem:[#allocation4 + $0x78] sm:$0xff]
    %v905 = vsel %vm319, %v172, 0.0
    %v906 = vsel %vm320, %v177, 0.0
    %v907 = vsel %vm321, %v182, 0.0
    %v908 = vsel %vm322, %v187, 0.0
    %v909 = vsel %vm323, %v192, 0.0
    %v910 = vsel %vm324, %v197, 0.0
    %v911 = vsel %vm325, %v202, 0.0
    %v912 = vsel %vm326, %v207, 0.0
    %v913 = vsel %vm327, %v212, 0.0
    %v914 = vsel %vm328, %v217, 0.0
    %v915 = vsel %vm329, %v222, 0.0
    %v916 = vsel %vm330, %v227, 0.0
    %v917 = vsel %vm331, %v232, 0.0
    %v918 = vsel %vm332, %v237, 0.0
    %v919 = vsel %vm333, %v242, 0.0
    %v920 = vsel %vm334, %v247, 0.0
    %921 = vadd.xlane.f32.xlu0 %v905
    %v922 = vpop.xlane.xlu0 %921
    %923 = vadd.xlane.f32.xlu0 %v906
    %v924 = vpop.xlane.xlu0 %923
    %925 = vadd.xlane.f32.xlu0 %v907
    %v926 = vpop.xlane.xlu0 %925
    %927 = vadd.xlane.f32.xlu0 %v908
    %v928 = vpop.xlane.xlu0 %927
    %929 = vadd.xlane.f32.xlu0 %v909
    %v930 = vpop.xlane.xlu0 %929
    %931 = vadd.xlane.f32.xlu0 %v910
    %v932 = vpop.xlane.xlu0 %931
    %933 = vadd.xlane.f32.xlu0 %v911
    %v934 = vpop.xlane.xlu0 %933
    %935 = vadd.xlane.f32.xlu0 %v912
    %v936 = vpop.xlane.xlu0 %935
    %937 = vadd.xlane.f32.xlu0 %v913
    %v938 = vpop.xlane.xlu0 %937
    %939 = vadd.xlane.f32.xlu0 %v914
    %v940 = vpop.xlane.xlu0 %939
    %941 = vadd.xlane.f32.xlu0 %v915
    %v942 = vpop.xlane.xlu0 %941
    %943 = vadd.xlane.f32.xlu0 %v916
    %v944 = vpop.xlane.xlu0 %943
    %945 = vadd.xlane.f32.xlu0 %v917
    %v946 = vpop.xlane.xlu0 %945
    %947 = vadd.xlane.f32.xlu0 %v918
    %v948 = vpop.xlane.xlu0 %947
    %949 = vadd.xlane.f32.xlu0 %v919
    %v950 = vpop.xlane.xlu0 %949
    %951 = vadd.xlane.f32.xlu0 %v920
    %v952 = vpop.xlane.xlu0 %951
    %v953 = vadd.f32 %v889, %v922
    %v954 = vadd.f32 %v890, %v924
    %v955 = vadd.f32 %v891, %v926
    %v956 = vadd.f32 %v892, %v928
    %v957 = vadd.f32 %v893, %v930
    %v958 = vadd.f32 %v894, %v932
    %v959 = vadd.f32 %v895, %v934
    %v960 = vadd.f32 %v896, %v936
    %v961 = vadd.f32 %v897, %v938
    %v962 = vadd.f32 %v898, %v940
    %v963 = vadd.f32 %v899, %v942
    %v964 = vadd.f32 %v900, %v944
    %v965 = vadd.f32 %v901, %v946
    %v966 = vadd.f32 %v902, %v948
    %v967 = vadd.f32 %v903, %v950
    %v968 = vadd.f32 %v904, %v952
    %vm969 = vcmask 7168
    %970 = vst.msk [vmem:[#allocation4] sm:$0xff] %vm969, %v953
    %971 = vst.msk [vmem:[#allocation4 + $0x8] sm:$0xff] %vm969, %v954
    %972 = vst.msk [vmem:[#allocation4 + $0x10] sm:$0xff] %vm969, %v955
    %973 = vst.msk [vmem:[#allocation4 + $0x18] sm:$0xff] %vm969, %v956
    %974 = vst.msk [vmem:[#allocation4 + $0x20] sm:$0xff] %vm969, %v957
    %975 = vst.msk [vmem:[#allocation4 + $0x28] sm:$0xff] %vm969, %v958
    %976 = vst.msk [vmem:[#allocation4 + $0x30] sm:$0xff] %vm969, %v959
    %977 = vst.msk [vmem:[#allocation4 + $0x38] sm:$0xff] %vm969, %v960
    %978 = vst.msk [vmem:[#allocation4 + $0x40] sm:$0xff] %vm969, %v961
    %979 = vst.msk [vmem:[#allocation4 + $0x48] sm:$0xff] %vm969, %v962
    %980 = vst.msk [vmem:[#allocation4 + $0x50] sm:$0xff] %vm969, %v963
    %981 = vst.msk [vmem:[#allocation4 + $0x58] sm:$0xff] %vm969, %v964
    %982 = vst.msk [vmem:[#allocation4 + $0x60] sm:$0xff] %vm969, %v965
    %983 = vst.msk [vmem:[#allocation4 + $0x68] sm:$0xff] %vm969, %v966
    %984 = vst.msk [vmem:[#allocation4 + $0x70] sm:$0xff] %vm969, %v967
    %985 = vst.msk [vmem:[#allocation4 + $0x78] sm:$0xff] %vm969, %v968
    %v986 = vld [vmem:[#allocation3] sm:$0xff]
    %v987 = vld [vmem:[#allocation3 + $0x8] sm:$0xff]
    %v988 = vld [vmem:[#allocation3 + $0x10] sm:$0xff]
    %v989 = vld [vmem:[#allocation3 + $0x18] sm:$0xff]
    %v990 = vld [vmem:[#allocation3 + $0x20] sm:$0xff]
    %v991 = vld [vmem:[#allocation3 + $0x28] sm:$0xff]
    %v992 = vld [vmem:[#allocation3 + $0x30] sm:$0xff]
    %v993 = vld [vmem:[#allocation3 + $0x38] sm:$0xff]
    %v994 = vld [vmem:[#allocation3 + $0x40] sm:$0xff]
    %v995 = vld [vmem:[#allocation3 + $0x48] sm:$0xff]
    %v996 = vld [vmem:[#allocation3 + $0x50] sm:$0xff]
    %v997 = vld [vmem:[#allocation3 + $0x58] sm:$0xff]
    %v998 = vld [vmem:[#allocation3 + $0x60] sm:$0xff]
    %v999 = vld [vmem:[#allocation3 + $0x68] sm:$0xff]
    %v1000 = vld [vmem:[#allocation3 + $0x70] sm:$0xff]
    %v1001 = vld [vmem:[#allocation3 + $0x78] sm:$0xff]
    %v1002 = vmul.f32 %v416, %v986
    %v1003 = vmul.f32 %v418, %v987
    %v1004 = vmul.f32 %v420, %v988
    %v1005 = vmul.f32 %v422, %v989
    %v1006 = vmul.f32 %v424, %v990
    %v1007 = vmul.f32 %v426, %v991
    %v1008 = vmul.f32 %v428, %v992
    %v1009 = vmul.f32 %v430, %v993
    %v1010 = vmul.f32 %v432, %v994
    %v1011 = vmul.f32 %v434, %v995
    %v1012 = vmul.f32 %v436, %v996
    %v1013 = vmul.f32 %v438, %v997
    %v1014 = vmul.f32 %v440, %v998
    %v1015 = vmul.f32 %v442, %v999
    %v1016 = vmul.f32 %v444, %v1000
    %v1017 = vmul.f32 %v446, %v1001
    %1018 = vadd.xlane.f32.xlu0 %v544
    %v1019 = vpop.xlane.xlu0 %1018
    %1020 = vadd.xlane.f32.xlu0 %v546
    %v1021 = vpop.xlane.xlu0 %1020
    %1022 = vadd.xlane.f32.xlu0 %v548
    %v1023 = vpop.xlane.xlu0 %1022
    %1024 = vadd.xlane.f32.xlu0 %v550
    %v1025 = vpop.xlane.xlu0 %1024
    %1026 = vadd.xlane.f32.xlu0 %v552
    %v1027 = vpop.xlane.xlu0 %1026
    %1028 = vadd.xlane.f32.xlu0 %v554
    %v1029 = vpop.xlane.xlu0 %1028
    %1030 = vadd.xlane.f32.xlu0 %v556
    %v1031 = vpop.xlane.xlu0 %1030
    %1032 = vadd.xlane.f32.xlu0 %v558
    %v1033 = vpop.xlane.xlu0 %1032
    %1034 = vadd.xlane.f32.xlu0 %v560
    %v1035 = vpop.xlane.xlu0 %1034
    %1036 = vadd.xlane.f32.xlu0 %v562
    %v1037 = vpop.xlane.xlu0 %1036
    %1038 = vadd.xlane.f32.xlu0 %v564
    %v1039 = vpop.xlane.xlu0 %1038
    %1040 = vadd.xlane.f32.xlu0 %v566
    %v1041 = vpop.xlane.xlu0 %1040
    %1042 = vadd.xlane.f32.xlu0 %v568
    %v1043 = vpop.xlane.xlu0 %1042
    %1044 = vadd.xlane.f32.xlu0 %v570
    %v1045 = vpop.xlane.xlu0 %1044
    %1046 = vadd.xlane.f32.xlu0 %v572
    %v1047 = vpop.xlane.xlu0 %1046
    %1048 = vadd.xlane.f32.xlu0 %v574
    %v1049 = vpop.xlane.xlu0 %1048
    %v1050 = vadd.f32 %v1002, %v1019
    %v1051 = vadd.f32 %v1003, %v1021
    %v1052 = vadd.f32 %v1004, %v1023
    %v1053 = vadd.f32 %v1005, %v1025
    %v1054 = vadd.f32 %v1006, %v1027
    %v1055 = vadd.f32 %v1007, %v1029
    %v1056 = vadd.f32 %v1008, %v1031
    %v1057 = vadd.f32 %v1009, %v1033
    %v1058 = vadd.f32 %v1010, %v1035
    %v1059 = vadd.f32 %v1011, %v1037
    %v1060 = vadd.f32 %v1012, %v1039
    %v1061 = vadd.f32 %v1013, %v1041
    %v1062 = vadd.f32 %v1014, %v1043
    %v1063 = vadd.f32 %v1015, %v1045
    %v1064 = vadd.f32 %v1016, %v1047
    %v1065 = vadd.f32 %v1017, %v1049
    %1066 = vst.msk [vmem:[#allocation3] sm:$0xff] %vm969, %v1050
    %1067 = vst.msk [vmem:[#allocation3 + $0x8] sm:$0xff] %vm969, %v1051
    %1068 = vst.msk [vmem:[#allocation3 + $0x10] sm:$0xff] %vm969, %v1052
    %1069 = vst.msk [vmem:[#allocation3 + $0x18] sm:$0xff] %vm969, %v1053
    %1070 = vst.msk [vmem:[#allocation3 + $0x20] sm:$0xff] %vm969, %v1054
    %1071 = vst.msk [vmem:[#allocation3 + $0x28] sm:$0xff] %vm969, %v1055
    %1072 = vst.msk [vmem:[#allocation3 + $0x30] sm:$0xff] %vm969, %v1056
    %1073 = vst.msk [vmem:[#allocation3 + $0x38] sm:$0xff] %vm969, %v1057
    %1074 = vst.msk [vmem:[#allocation3 + $0x40] sm:$0xff] %vm969, %v1058
    %1075 = vst.msk [vmem:[#allocation3 + $0x48] sm:$0xff] %vm969, %v1059
    %1076 = vst.msk [vmem:[#allocation3 + $0x50] sm:$0xff] %vm969, %v1060
    %1077 = vst.msk [vmem:[#allocation3 + $0x58] sm:$0xff] %vm969, %v1061
    %1078 = vst.msk [vmem:[#allocation3 + $0x60] sm:$0xff] %vm969, %v1062
    %1079 = vst.msk [vmem:[#allocation3 + $0x68] sm:$0xff] %vm969, %v1063
    %1080 = vst.msk [vmem:[#allocation3 + $0x70] sm:$0xff] %vm969, %v1064
    %1081 = vst.msk [vmem:[#allocation3 + $0x78] sm:$0xff] %vm969, %v1065
  $region33: #{tpu_custom_call.1} parent=0 // pred_fallthru
    _
  %vm1082 = vcmask 7168
  %1083 = vst.msk [vmem:[#allocation2] sm:$0xff] %vm1082, %v383
  %1084 = vst.msk [vmem:[#allocation2 + $0x8] sm:$0xff] %vm1082, %v384
  %1085 = vst.msk [vmem:[#allocation2 + $0x10] sm:$0xff] %vm1082, %v385
  %1086 = vst.msk [vmem:[#allocation2 + $0x18] sm:$0xff] %vm1082, %v386
  %1087 = vst.msk [vmem:[#allocation2 + $0x20] sm:$0xff] %vm1082, %v387
  %1088 = vst.msk [vmem:[#allocation2 + $0x28] sm:$0xff] %vm1082, %v388
  %1089 = vst.msk [vmem:[#allocation2 + $0x30] sm:$0xff] %vm1082, %v389
  %1090 = vst.msk [vmem:[#allocation2 + $0x38] sm:$0xff] %vm1082, %v390
  %1091 = vst.msk [vmem:[#allocation2 + $0x40] sm:$0xff] %vm1082, %v391
  %1092 = vst.msk [vmem:[#allocation2 + $0x48] sm:$0xff] %vm1082, %v392
  %1093 = vst.msk [vmem:[#allocation2 + $0x50] sm:$0xff] %vm1082, %v393
  %1094 = vst.msk [vmem:[#allocation2 + $0x58] sm:$0xff] %vm1082, %v394
  %1095 = vst.msk [vmem:[#allocation2 + $0x60] sm:$0xff] %vm1082, %v395
  %1096 = vst.msk [vmem:[#allocation2 + $0x68] sm:$0xff] %vm1082, %v396
  %1097 = vst.msk [vmem:[#allocation2 + $0x70] sm:$0xff] %vm1082, %v397
  %1098 = vst.msk [vmem:[#allocation2 + $0x78] sm:$0xff] %vm1082, %v398
  // Predicated region
  $region34: #{tpu_custom_call.1} parent=0 // pred_check
    %p1099 = pneg %p20
  $region35: #{tpu_custom_call.1} parent=0 // pred_check_branch
    %1101 = sbr.rel (%p1099) target = $region37
  $region36: #{tpu_custom_call.1} parent=0 // pred_region
    %v1102 = vld [vmem:[#allocation2] sm:$0xff]
    %v1103 = vld [vmem:[#allocation2 + $0x8] sm:$0xff]
    %v1104 = vld [vmem:[#allocation2 + $0x10] sm:$0xff]
    %v1105 = vld [vmem:[#allocation2 + $0x18] sm:$0xff]
    %v1106 = vld [vmem:[#allocation2 + $0x20] sm:$0xff]
    %v1107 = vld [vmem:[#allocation2 + $0x28] sm:$0xff]
    %v1108 = vld [vmem:[#allocation2 + $0x30] sm:$0xff]
    %v1109 = vld [vmem:[#allocation2 + $0x38] sm:$0xff]
    %v1110 = vld [vmem:[#allocation2 + $0x40] sm:$0xff]
    %v1111 = vld [vmem:[#allocation2 + $0x48] sm:$0xff]
    %v1112 = vld [vmem:[#allocation2 + $0x50] sm:$0xff]
    %v1113 = vld [vmem:[#allocation2 + $0x58] sm:$0xff]
    %v1114 = vld [vmem:[#allocation2 + $0x60] sm:$0xff]
    %v1115 = vld [vmem:[#allocation2 + $0x68] sm:$0xff]
    %v1116 = vld [vmem:[#allocation2 + $0x70] sm:$0xff]
    %v1117 = vld [vmem:[#allocation2 + $0x78] sm:$0xff]
    %v1118 = vld [vmem:[#allocation3] sm:$0xff]
    %v1119 = vld [vmem:[#allocation3 + $0x8] sm:$0xff]
    %v1120 = vld [vmem:[#allocation3 + $0x10] sm:$0xff]
    %v1121 = vld [vmem:[#allocation3 + $0x18] sm:$0xff]
    %v1122 = vld [vmem:[#allocation3 + $0x20] sm:$0xff]
    %v1123 = vld [vmem:[#allocation3 + $0x28] sm:$0xff]
    %v1124 = vld [vmem:[#allocation3 + $0x30] sm:$0xff]
    %v1125 = vld [vmem:[#allocation3 + $0x38] sm:$0xff]
    %v1126 = vld [vmem:[#allocation3 + $0x40] sm:$0xff]
    %v1127 = vld [vmem:[#allocation3 + $0x48] sm:$0xff]
    %v1128 = vld [vmem:[#allocation3 + $0x50] sm:$0xff]
    %v1129 = vld [vmem:[#allocation3 + $0x58] sm:$0xff]
    %v1130 = vld [vmem:[#allocation3 + $0x60] sm:$0xff]
    %v1131 = vld [vmem:[#allocation3 + $0x68] sm:$0xff]
    %v1132 = vld [vmem:[#allocation3 + $0x70] sm:$0xff]
    %v1133 = vld [vmem:[#allocation3 + $0x78] sm:$0xff]
    %v1134 = vlog2.pop %v1118
    %v1135 = vmul.f32 %v1134, 0.6931472
    %v1136 = vlog2.pop %v1119
    %v1137 = vmul.f32 %v1136, 0.6931472
    %v1138 = vlog2.pop %v1120
    %v1139 = vmul.f32 %v1138, 0.6931472
    %v1140 = vlog2.pop %v1121
    %v1141 = vmul.f32 %v1140, 0.6931472
    %v1142 = vlog2.pop %v1122
    %v1143 = vmul.f32 %v1142, 0.6931472
    %v1144 = vlog2.pop %v1123
    %v1145 = vmul.f32 %v1144, 0.6931472
    %v1146 = vlog2.pop %v1124
    %v1147 = vmul.f32 %v1146, 0.6931472
    %v1148 = vlog2.pop %v1125
    %v1149 = vmul.f32 %v1148, 0.6931472
    %v1150 = vlog2.pop %v1126
    %v1151 = vmul.f32 %v1150, 0.6931472
    %v1152 = vlog2.pop %v1127
    %v1153 = vmul.f32 %v1152, 0.6931472
    %v1154 = vlog2.pop %v1128
    %v1155 = vmul.f32 %v1154, 0.6931472
    %v1156 = vlog2.pop %v1129
    %v1157 = vmul.f32 %v1156, 0.6931472
    %v1158 = vlog2.pop %v1130
    %v1159 = vmul.f32 %v1158, 0.6931472
    %v1160 = vlog2.pop %v1131
    %v1161 = vmul.f32 %v1160, 0.6931472
    %v1162 = vlog2.pop %v1132
    %v1163 = vmul.f32 %v1162, 0.6931472
    %v1164 = vlog2.pop %v1133
    %v1165 = vmul.f32 %v1164, 0.6931472
    %v1166 = vadd.f32 %v1102, %v1135
    %v1167 = vadd.f32 %v1103, %v1137
    %v1168 = vadd.f32 %v1104, %v1139
    %v1169 = vadd.f32 %v1105, %v1141
    %v1170 = vadd.f32 %v1106, %v1143
    %v1171 = vadd.f32 %v1107, %v1145
    %v1172 = vadd.f32 %v1108, %v1147
    %v1173 = vadd.f32 %v1109, %v1149
    %v1174 = vadd.f32 %v1110, %v1151
    %v1175 = vadd.f32 %v1111, %v1153
    %v1176 = vadd.f32 %v1112, %v1155
    %v1177 = vadd.f32 %v1113, %v1157
    %v1178 = vadd.f32 %v1114, %v1159
    %v1179 = vadd.f32 %v1115, %v1161
    %v1180 = vadd.f32 %v1116, %v1163
    %v1181 = vadd.f32 %v1117, %v1165
    %v1182 = vld [vmem:[%s2] sm:$0xff]
    %v1183 = vld [vmem:[%s2 + $0x8] sm:$0xff]
    %v1184 = vld [vmem:[%s2 + $0x10] sm:$0xff]
    %v1185 = vld [vmem:[%s2 + $0x18] sm:$0xff]
    %v1186 = vld [vmem:[%s2 + $0x20] sm:$0xff]
    %v1187 = vld [vmem:[%s2 + $0x28] sm:$0xff]
    %v1188 = vld [vmem:[%s2 + $0x30] sm:$0xff]
    %v1189 = vld [vmem:[%s2 + $0x38] sm:$0xff]
    %v1190 = vld [vmem:[%s2 + $0x40] sm:$0xff]
    %v1191 = vld [vmem:[%s2 + $0x48] sm:$0xff]
    %v1192 = vld [vmem:[%s2 + $0x50] sm:$0xff]
    %v1193 = vld [vmem:[%s2 + $0x58] sm:$0xff]
    %v1194 = vld [vmem:[%s2 + $0x60] sm:$0xff]
    %v1195 = vld [vmem:[%s2 + $0x68] sm:$0xff]
    %v1196 = vld [vmem:[%s2 + $0x70] sm:$0xff]
    %v1197 = vld [vmem:[%s2 + $0x78] sm:$0xff]
    %v1198 = vmax.f32 %v1182, 1.0
    %v1199 = vmax.f32 %v1183, 1.0
    %v1200 = vmax.f32 %v1184, 1.0
    %v1201 = vmax.f32 %v1185, 1.0
    %v1202 = vmax.f32 %v1186, 1.0
    %v1203 = vmax.f32 %v1187, 1.0
    %v1204 = vmax.f32 %v1188, 1.0
    %v1205 = vmax.f32 %v1189, 1.0
    %v1206 = vmax.f32 %v1190, 1.0
    %v1207 = vmax.f32 %v1191, 1.0
    %v1208 = vmax.f32 %v1192, 1.0
    %v1209 = vmax.f32 %v1193, 1.0
    %v1210 = vmax.f32 %v1194, 1.0
    %v1211 = vmax.f32 %v1195, 1.0
    %v1212 = vmax.f32 %v1196, 1.0
    %v1213 = vmax.f32 %v1197, 1.0
    %v1214 = vld [vmem:[#allocation4] sm:$0xff]
    %v1215 = vld [vmem:[#allocation4 + $0x8] sm:$0xff]
    %v1216 = vld [vmem:[#allocation4 + $0x10] sm:$0xff]
    %v1217 = vld [vmem:[#allocation4 + $0x18] sm:$0xff]
    %v1218 = vld [vmem:[#allocation4 + $0x20] sm:$0xff]
    %v1219 = vld [vmem:[#allocation4 + $0x28] sm:$0xff]
    %v1220 = vld [vmem:[#allocation4 + $0x30] sm:$0xff]
    %v1221 = vld [vmem:[#allocation4 + $0x38] sm:$0xff]
    %v1222 = vld [vmem:[#allocation4 + $0x40] sm:$0xff]
    %v1223 = vld [vmem:[#allocation4 + $0x48] sm:$0xff]
    %v1224 = vld [vmem:[#allocation4 + $0x50] sm:$0xff]
    %v1225 = vld [vmem:[#allocation4 + $0x58] sm:$0xff]
    %v1226 = vld [vmem:[#allocation4 + $0x60] sm:$0xff]
    %v1227 = vld [vmem:[#allocation4 + $0x68] sm:$0xff]
    %v1228 = vld [vmem:[#allocation4 + $0x70] sm:$0xff]
    %v1229 = vld [vmem:[#allocation4 + $0x78] sm:$0xff]
    %v1230 = vmul.f32 %v1182, %v1166
    %v1231 = vmul.f32 %v1183, %v1167
    %v1232 = vmul.f32 %v1184, %v1168
    %v1233 = vmul.f32 %v1185, %v1169
    %v1234 = vmul.f32 %v1186, %v1170
    %v1235 = vmul.f32 %v1187, %v1171
    %v1236 = vmul.f32 %v1188, %v1172
    %v1237 = vmul.f32 %v1189, %v1173
    %v1238 = vmul.f32 %v1190, %v1174
    %v1239 = vmul.f32 %v1191, %v1175
    %v1240 = vmul.f32 %v1192, %v1176
    %v1241 = vmul.f32 %v1193, %v1177
    %v1242 = vmul.f32 %v1194, %v1178
    %v1243 = vmul.f32 %v1195, %v1179
    %v1244 = vmul.f32 %v1196, %v1180
    %v1245 = vmul.f32 %v1197, %v1181
    %v1246 = vsub.f32 %v1214, %v1230
    %v1247 = vsub.f32 %v1215, %v1231
    %v1248 = vsub.f32 %v1216, %v1232
    %v1249 = vsub.f32 %v1217, %v1233
    %v1250 = vsub.f32 %v1218, %v1234
    %v1251 = vsub.f32 %v1219, %v1235
    %v1252 = vsub.f32 %v1220, %v1236
    %v1253 = vsub.f32 %v1221, %v1237
    %v1254 = vsub.f32 %v1222, %v1238
    %v1255 = vsub.f32 %v1223, %v1239
    %v1256 = vsub.f32 %v1224, %v1240
    %v1257 = vsub.f32 %v1225, %v1241
    %v1258 = vsub.f32 %v1226, %v1242
    %v1259 = vsub.f32 %v1227, %v1243
    %v1260 = vsub.f32 %v1228, %v1244
    %v1261 = vsub.f32 %v1229, %v1245
    %v1262 = vrcp.pop %v1198
    %v1263 = vmul.f32 %v1246, %v1262
    %v1264 = vrcp.pop %v1199
    %v1265 = vmul.f32 %v1247, %v1264
    %v1266 = vrcp.pop %v1200
    %v1267 = vmul.f32 %v1248, %v1266
    %v1268 = vrcp.pop %v1201
    %v1269 = vmul.f32 %v1249, %v1268
    %v1270 = vrcp.pop %v1202
    %v1271 = vmul.f32 %v1250, %v1270
    %v1272 = vrcp.pop %v1203
    %v1273 = vmul.f32 %v1251, %v1272
    %v1274 = vrcp.pop %v1204
    %v1275 = vmul.f32 %v1252, %v1274
    %v1276 = vrcp.pop %v1205
    %v1277 = vmul.f32 %v1253, %v1276
    %v1278 = vrcp.pop %v1206
    %v1279 = vmul.f32 %v1254, %v1278
    %v1280 = vrcp.pop %v1207
    %v1281 = vmul.f32 %v1255, %v1280
    %v1282 = vrcp.pop %v1208
    %v1283 = vmul.f32 %v1256, %v1282
    %v1284 = vrcp.pop %v1209
    %v1285 = vmul.f32 %v1257, %v1284
    %v1286 = vrcp.pop %v1210
    %v1287 = vmul.f32 %v1258, %v1286
    %v1288 = vrcp.pop %v1211
    %v1289 = vmul.f32 %v1259, %v1288
    %v1290 = vrcp.pop %v1212
    %v1291 = vmul.f32 %v1260, %v1290
    %v1292 = vrcp.pop %v1213
    %v1293 = vmul.f32 %v1261, %v1292
    %vm1294 = vcmp.gt.f32.partialorder %v1182, 0.0
    %vm1295 = vcmp.gt.f32.partialorder %v1183, 0.0
    %vm1296 = vcmp.gt.f32.partialorder %v1184, 0.0
    %vm1297 = vcmp.gt.f32.partialorder %v1185, 0.0
    %vm1298 = vcmp.gt.f32.partialorder %v1186, 0.0
    %vm1299 = vcmp.gt.f32.partialorder %v1187, 0.0
    %vm1300 = vcmp.gt.f32.partialorder %v1188, 0.0
    %vm1301 = vcmp.gt.f32.partialorder %v1189, 0.0
    %vm1302 = vcmp.gt.f32.partialorder %v1190, 0.0
    %vm1303 = vcmp.gt.f32.partialorder %v1191, 0.0
    %vm1304 = vcmp.gt.f32.partialorder %v1192, 0.0
    %vm1305 = vcmp.gt.f32.partialorder %v1193, 0.0
    %vm1306 = vcmp.gt.f32.partialorder %v1194, 0.0
    %vm1307 = vcmp.gt.f32.partialorder %v1195, 0.0
    %vm1308 = vcmp.gt.f32.partialorder %v1196, 0.0
    %vm1309 = vcmp.gt.f32.partialorder %v1197, 0.0
    %v1310 = vmul.f32 %v1263, -1.0
    %v1311 = vmul.f32 %v1265, -1.0
    %v1312 = vmul.f32 %v1267, -1.0
    %v1313 = vmul.f32 %v1269, -1.0
    %v1314 = vmul.f32 %v1271, -1.0
    %v1315 = vmul.f32 %v1273, -1.0
    %v1316 = vmul.f32 %v1275, -1.0
    %v1317 = vmul.f32 %v1277, -1.0
    %v1318 = vmul.f32 %v1279, -1.0
    %v1319 = vmul.f32 %v1281, -1.0
    %v1320 = vmul.f32 %v1283, -1.0
    %v1321 = vmul.f32 %v1285, -1.0
    %v1322 = vmul.f32 %v1287, -1.0
    %v1323 = vmul.f32 %v1289, -1.0
    %v1324 = vmul.f32 %v1291, -1.0
    %v1325 = vmul.f32 %v1293, -1.0
    %v1326 = vsel %vm1294, %v1310, 0.0
    %v1327 = vsel %vm1295, %v1311, 0.0
    %v1328 = vsel %vm1296, %v1312, 0.0
    %v1329 = vsel %vm1297, %v1313, 0.0
    %v1330 = vsel %vm1298, %v1314, 0.0
    %v1331 = vsel %vm1299, %v1315, 0.0
    %v1332 = vsel %vm1300, %v1316, 0.0
    %v1333 = vsel %vm1301, %v1317, 0.0
    %v1334 = vsel %vm1302, %v1318, 0.0
    %v1335 = vsel %vm1303, %v1319, 0.0
    %v1336 = vsel %vm1304, %v1320, 0.0
    %v1337 = vsel %vm1305, %v1321, 0.0
    %v1338 = vsel %vm1306, %v1322, 0.0
    %v1339 = vsel %vm1307, %v1323, 0.0
    %v1340 = vsel %vm1308, %v1324, 0.0
    %v1341 = vsel %vm1309, %v1325, 0.0
    %1342 = vst.msk [vmem:[%s5] sm:$0xff] %vm1082, %v1326
    %1343 = vst.msk [vmem:[%s5 + $0x8] sm:$0xff] %vm1082, %v1327
    %1344 = vst.msk [vmem:[%s5 + $0x10] sm:$0xff] %vm1082, %v1328
    %1345 = vst.msk [vmem:[%s5 + $0x18] sm:$0xff] %vm1082, %v1329
    %1346 = vst.msk [vmem:[%s5 + $0x20] sm:$0xff] %vm1082, %v1330
    %1347 = vst.msk [vmem:[%s5 + $0x28] sm:$0xff] %vm1082, %v1331
    %1348 = vst.msk [vmem:[%s5 + $0x30] sm:$0xff] %vm1082, %v1332
    %1349 = vst.msk [vmem:[%s5 + $0x38] sm:$0xff] %vm1082, %v1333
    %1350 = vst.msk [vmem:[%s5 + $0x40] sm:$0xff] %vm1082, %v1334
    %1351 = vst.msk [vmem:[%s5 + $0x48] sm:$0xff] %vm1082, %v1335
    %1352 = vst.msk [vmem:[%s5 + $0x50] sm:$0xff] %vm1082, %v1336
    %1353 = vst.msk [vmem:[%s5 + $0x58] sm:$0xff] %vm1082, %v1337
    %1354 = vst.msk [vmem:[%s5 + $0x60] sm:$0xff] %vm1082, %v1338
    %1355 = vst.msk [vmem:[%s5 + $0x68] sm:$0xff] %vm1082, %v1339
    %1356 = vst.msk [vmem:[%s5 + $0x70] sm:$0xff] %vm1082, %v1340
    %1357 = vst.msk [vmem:[%s5 + $0x78] sm:$0xff] %vm1082, %v1341
  $region37: #{tpu_custom_call.1} parent=0 // pred_fallthru
    _
  // Predicated region
  $region38: #{tpu_custom_call.1} parent=0 // pred_check
    _
  $region39: #{tpu_custom_call.1} parent=0 // pred_check_branch
    %1359 = sbr.rel (0) target = $region41
  $region40: #{tpu_custom_call.1} parent=0 // pred_region
    _
  $region41: #{tpu_custom_call.1} parent=0 // pred_fallthru
    _
  // Predicated region
  $region42: #{tpu_custom_call.1} parent=0 // pred_check
    _
  $region43: #{tpu_custom_call.1} parent=0 // pred_check_branch
    %1361 = sbr.rel (0) target = $region45
  $region44: #{tpu_custom_call.1} parent=0 // pred_region
    _
  $region45: #{tpu_custom_call.1} parent=0 // pred_fallthru
    _

</llo_original>
